<compile_context>
chip_gen: v5e
topology: v5e:2x2
jax: 0.10.0
libtpu: 0.0.40
codegen_flags: <defaults>
</compile_context>

<pallas_src>
import jax
import jax.numpy as jnp
from jax.experimental import pallas as pl
from jax.experimental.pallas import tpu as pltpu


def bottleneck_kernel(x_ref, halo_ref, w1_ref, w2_ref, w3_ref,
                      b1_ref, b2_ref, b3_ref, o_ref):
    TH, W, Cin = x_ref.shape[1], x_ref.shape[2], x_ref.shape[3]
    hid = w1_ref.shape[1]
    Cout = w3_ref.shape[1]
    r = pl.program_id(1)
    nr = pl.num_programs(1)

    # Extended row block: halo row above + TH rows + halo row below.
    halo = halo_ref[0, 0]                                       # (2, W, Cin)
    x_ext = jnp.concatenate([halo[0:1], x_ref[0], halo[1:2]], axis=0)

    # ---- conv1 (1x1, BN scale folded into w1) + bias + relu ----
    x2d = x_ext.reshape((TH + 2) * W, Cin).astype(jnp.bfloat16)
    h1 = jnp.dot(x2d, w1_ref[...], preferred_element_type=jnp.float32)
    h1 = jnp.maximum(h1 + b1_ref[...], 0.0).reshape(TH + 2, W, hid)

    # Zero halo rows that fall outside the image so conv2 sees zero padding
    # (conv1 of a zero-padded row would otherwise produce relu(bias) != 0).
    row = jax.lax.broadcasted_iota(jnp.int32, (TH + 2, 1, 1), 0)
    valid = jnp.logical_and(jnp.logical_or(r > 0, row > 0),
                            jnp.logical_or(r < nr - 1, row < TH + 1))
    h1 = jnp.where(valid, h1, 0.0).astype(jnp.bfloat16)

    # ---- conv2 (3x3, stride 1, pad 1): im2col over dx -> 3 matmuls, K=3*hid ----
    h1p = jnp.pad(h1, ((0, 0), (1, 1), (0, 0)))                 # pad W only
    acc = jnp.zeros((TH * W, hid), jnp.float32)
    for dy in range(3):
        rows = h1p[dy:dy + TH]                                  # (TH, W+2, hid)
        patch = jnp.concatenate(
            [rows[:, 0:W], rows[:, 1:W + 1], rows[:, 2:W + 2]], axis=-1)
        acc = acc + jnp.dot(patch.reshape(TH * W, 3 * hid), w2_ref[dy],
                            preferred_element_type=jnp.float32)
    h2 = jnp.maximum(acc + b2_ref[...], 0.0).astype(jnp.bfloat16)

    # ---- conv3 (1x1) + bias + residual + relu ----
    h3 = jnp.dot(h2, w3_ref[...], preferred_element_type=jnp.float32)
    h3 = h3 + b3_ref[...]
    res = x_ref[0].astype(jnp.float32).reshape(TH * W, Cin)     # late re-read
    out = jnp.maximum(h3 + res, 0.0)
    o_ref[0] = out.reshape(TH, W, Cout).astype(o_ref.dtype)


def _fold_bn(gamma, beta, mean, var, eps):
    scale = gamma / jnp.sqrt(var + eps)
    bias = beta - mean * scale
    return scale, bias


def bottleneck_block_nhwc(x, params, eps=1e-5, block_h=8):
    """Fused bottleneck block on an NHWC input (preferred, transpose-free)."""
    N, H, W, Cin = x.shape
    hid = params["w1"].shape[1]
    Cout = params["w3"].shape[1]
    assert Cin == Cout, "downsample=None requires in_channels == 4*hid_channels"
    block_h = min(block_h, H)
    assert H % block_h == 0, "block_h must divide H"
    nb = H // block_h

    # Fold BN scale into conv weights (per output channel); keep only bias.
    s1, b1 = _fold_bn(*params["bn1"], eps)
    s2, b2 = _fold_bn(*params["bn2"], eps)
    s3, b3 = _fold_bn(*params["bn3"], eps)
    w1 = (params["w1"] * s1[None, :]).astype(jnp.bfloat16)              # (Cin, hid)
    w2 = (params["w2"] * s2[None, None, None, :]).reshape(3, 3 * hid, hid)
    w2 = w2.astype(jnp.bfloat16)                                        # (3, 3*hid, hid)
    w3 = (params["w3"] * s3[None, :]).astype(jnp.bfloat16)              # (hid, Cout)
    b1 = b1.reshape(1, hid).astype(jnp.float32)
    b2 = b2.reshape(1, hid).astype(jnp.float32)
    b3 = b3.reshape(1, Cout).astype(jnp.float32)

    # Per-row-block halo rows (zero outside the image), gathered once here.
    xp = jnp.pad(x, ((0, 0), (1, 1), (0, 0), (0, 0)))
    top = xp[:, 0:H:block_h]                    # row just above each block
    bot = xp[:, block_h + 1:H + 2:block_h]      # row just below each block
    halo = jnp.stack([top, bot], axis=2)        # (N, nb, 2, W, Cin)

    def full_spec(shape):
        nd = len(shape)
        return pl.BlockSpec(shape, lambda n, r, _nd=nd: (0,) * _nd)

    out = pl.pallas_call(
        bottleneck_kernel,
        out_shape=jax.ShapeDtypeStruct((N, H, W, Cout), x.dtype),
        grid=(N, nb),
        in_specs=[
            pl.BlockSpec((1, block_h, W, Cin), lambda n, r: (n, r, 0, 0)),
            pl.BlockSpec((1, 1, 2, W, Cin), lambda n, r: (n, r, 0, 0, 0)),
            full_spec(w1.shape), full_spec(w2.shape), full_spec(w3.shape),
            full_spec(b1.shape), full_spec(b2.shape), full_spec(b3.shape),
        ],
        out_specs=pl.BlockSpec((1, block_h, W, Cout), lambda n, r: (n, r, 0, 0)),
        compiler_params=pltpu.CompilerParams(
            dimension_semantics=("parallel", "parallel"),
            vmem_limit_bytes=32 * 1024 * 1024),
    )(x, halo, w1, w2, w3, b1, b2, b3)
    return out


def bottleneck_block(x_nchw, params, eps=1e-5, block_h=8):
    # PyTorch-parity NCHW wrapper.  For a full network, keep activations in
    # NHWC and call bottleneck_block_nhwc directly so the transposes are
    # hoisted to the model boundary.
    x = jnp.transpose(x_nchw, (0, 2, 3, 1))     # NCHW -> NHWC
    out = bottleneck_block_nhwc(x, params, eps=eps, block_h=block_h)
    return jnp.transpose(out, (0, 3, 1, 2))     # NHWC -> NCHW


def reference(x_nchw, params, eps=1e-5):
    """Pure-JAX f32 reference (eval-mode BN), NCHW in/out like PyTorch."""
    x = jnp.transpose(x_nchw, (0, 2, 3, 1))

    def conv(h, w_hwio, pad):
        return jax.lax.conv_general_dilated(
            h, w_hwio, window_strides=(1, 1), padding=pad,
            dimension_numbers=("NHWC", "HWIO", "NHWC"))

    def bn(h, gamma, beta, mean, var):
        return (h - mean) / jnp.sqrt(var + eps) * gamma + beta

    w1 = params["w1"].reshape(1, 1, *params["w1"].shape)
    w2 = params["w2"]
    w3 = params["w3"].reshape(1, 1, *params["w3"].shape)

    h = jax.nn.relu(bn(conv(x, w1, "VALID"), *params["bn1"]))
    h = jax.nn.relu(bn(conv(h, w2, "SAME"), *params["bn2"]))
    h = bn(conv(h, w3, "VALID"), *params["bn3"])
    out = jax.nn.relu(h + x)
    return jnp.transpose(out, (0, 3, 1, 2))


def make_params(key, in_channels, hid_channels):
    out_channels = hid_channels * 4
    ks = jax.random.split(key, 6)

    def bn_params(k, c):
        k1, k2, k3, k4 = jax.random.split(k, 4)
        gamma = 1.0 + 0.1 * jax.random.normal(k1, (c,), jnp.float32)
        beta = 0.1 * jax.random.normal(k2, (c,), jnp.float32)
        mean = 0.1 * jax.random.normal(k3, (c,), jnp.float32)
        var = 1.0 + 0.1 * jnp.abs(jax.random.normal(k4, (c,), jnp.float32))
        return (gamma, beta, mean, var)

    return {
        # conv weights stored as (C_in, C_out) / (kh, kw, C_in, C_out)
        # (i.e. transposed relative to PyTorch's (C_out, C_in, kh, kw))
        "w1": 0.1 * jax.random.normal(ks[0], (in_channels, hid_channels), jnp.float32),
        "w2": 0.1 * jax.random.normal(ks[1], (3, 3, hid_channels, hid_channels), jnp.float32),
        "w3": 0.1 * jax.random.normal(ks[2], (hid_channels, out_channels), jnp.float32),
        "bn1": bn_params(ks[3], hid_channels),
        "bn2": bn_params(ks[4], hid_channels),
        "bn3": bn_params(ks[5], out_channels),
    }


if __name__ == "__main__":
    key = jax.random.PRNGKey(0)
    k_x, k_p = jax.random.split(key)

    N, hid, H, W = 2, 4, 16, 16
    Cin = hid * 4                      # residual add requires Cin == 4*hid
    x = jax.random.normal(k_x, (N, Cin, H, W), jnp.float32)   # PyTorch NCHW input
    params = make_params(k_p, Cin, hid)

    out = jax.block_until_ready(bottleneck_block(x, params))
    ref = jax.block_until_ready(reference(x, params))
    assert out.shape == ref.shape == (N, Cin, H, W)
    # Tolerance reflects bf16 MXU operands (accumulation/epilogue are f32).
    max_err = float(jnp.max(jnp.abs(out - ref)))
    assert jnp.allclose(out, ref, rtol=2e-2, atol=2e-2), max_err

    print("KERNEL_OK")
</pallas_src>

<mosaic_0001>
module attributes {stable_mosaic.version = 11 : i64} {
  func.func @bottleneck_kernel(%arg0: i32, %arg1: i32, %arg2: memref<1x8x16x16xf32, #tpu.memory_space<vmem>>, %arg3: memref<1x1x2x16x16xf32, #tpu.memory_space<vmem>>, %arg4: memref<16x4xbf16, #tpu.memory_space<vmem>>, %arg5: memref<3x12x4xbf16, #tpu.memory_space<vmem>>, %arg6: memref<4x16xbf16, #tpu.memory_space<vmem>>, %arg7: memref<1x4xf32, #tpu.memory_space<vmem>>, %arg8: memref<1x4xf32, #tpu.memory_space<vmem>>, %arg9: memref<1x16xf32, #tpu.memory_space<vmem>>, %arg10: memref<1x8x16x16xf32, #tpu.memory_space<vmem>>) attributes {dimension_semantics = [#tpu.dimension_semantics<parallel>, #tpu.dimension_semantics<parallel>], iteration_bounds = array<i64: 2, 2>, scalar_prefetch = 0 : i64, scratch_operands = 0 : i64, tpu.core_type = #tpu.core_type<tc>, window_params = [{transform_indices = @transform_0, window_bounds = array<i64: 1, 8, 16, 16>}, {transform_indices = @transform_1, window_bounds = array<i64: 1, 1, 2, 16, 16>}, {pipeline_mode = #tpu.pipeline_mode<synchronous>, transform_indices = @transform_2, window_bounds = array<i64: 16, 4>}, {pipeline_mode = #tpu.pipeline_mode<synchronous>, transform_indices = @transform_3, window_bounds = array<i64: 3, 12, 4>}, {pipeline_mode = #tpu.pipeline_mode<synchronous>, transform_indices = @transform_4, window_bounds = array<i64: 4, 16>}, {pipeline_mode = #tpu.pipeline_mode<synchronous>, transform_indices = @transform_5, window_bounds = array<i64: 1, 4>}, {pipeline_mode = #tpu.pipeline_mode<synchronous>, transform_indices = @transform_6, window_bounds = array<i64: 1, 4>}, {pipeline_mode = #tpu.pipeline_mode<synchronous>, transform_indices = @transform_7, window_bounds = array<i64: 1, 16>}, {transform_indices = @transform_8, window_bounds = array<i64: 1, 8, 16, 16>}]} {
    %c0 = arith.constant 0 : index
    %c0_0 = arith.constant 0 : index
    %c0_1 = arith.constant 0 : index
    %c0_2 = arith.constant 0 : index
    %c0_3 = arith.constant 0 : index
    %0 = vector.load %arg3[%c0, %c0_0, %c0_1, %c0_2, %c0_3] : memref<1x1x2x16x16xf32, #tpu.memory_space<vmem>>, vector<1x1x2x16x16xf32>
    %1 = vector.shape_cast %0 : vector<1x1x2x16x16xf32> to vector<2x16x16xf32>
    %2 = vector.extract_strided_slice %1 {offsets = [0, 0, 0], sizes = [1, 16, 16], strides = [1, 1, 1]} : vector<2x16x16xf32> to vector<1x16x16xf32>
    %c0_4 = arith.constant 0 : index
    %c0_5 = arith.constant 0 : index
    %c0_6 = arith.constant 0 : index
    %c0_7 = arith.constant 0 : index
    %3 = vector.load %arg2[%c0_4, %c0_5, %c0_6, %c0_7] : memref<1x8x16x16xf32, #tpu.memory_space<vmem>>, vector<1x8x16x16xf32>
    %4 = vector.shape_cast %3 : vector<1x8x16x16xf32> to vector<8x16x16xf32>
    %5 = vector.extract_strided_slice %1 {offsets = [1, 0, 0], sizes = [1, 16, 16], strides = [1, 1, 1]} : vector<2x16x16xf32> to vector<1x16x16xf32>
    %6 = tpu.concatenate %2, %4, %5 in 0 : vector<1x16x16xf32>, vector<8x16x16xf32>, vector<1x16x16xf32> -> vector<10x16x16xf32>
    %7 = vector.shape_cast %6 : vector<10x16x16xf32> to vector<160x16xf32>
    %8 = arith.truncf %7 : vector<160x16xf32> to vector<160x16xbf16>
    %c0_8 = arith.constant 0 : index
    %c0_9 = arith.constant 0 : index
    %9 = vector.load %arg4[%c0_8, %c0_9] : memref<16x4xbf16, #tpu.memory_space<vmem>>, vector<16x4xbf16>
    %cst = arith.constant dense<0.000000e+00> : vector<160x4xf32>
    %10 = tpu.matmul %8, %9, %cst {dimension_numbers = #tpu.dot_dimension_numbers<[1], [0], [0], [1], [0, 0, 1, 1], [], []>} : vector<160x16xbf16>, vector<16x4xbf16>, vector<160x4xf32> -> vector<160x4xf32>
    %c0_10 = arith.constant 0 : index
    %c0_11 = arith.constant 0 : index
    %11 = vector.load %arg7[%c0_10, %c0_11] : memref<1x4xf32, #tpu.memory_space<vmem>>, vector<1x4xf32>
    %12 = vector.broadcast %11 : vector<1x4xf32> to vector<160x4xf32>
    %13 = arith.addf %10, %12 : vector<160x4xf32>
    %cst_12 = arith.constant 0.000000e+00 : f32
    %14 = vector.broadcast %cst_12 : f32 to vector<160x4xf32>
    %15 = arith.maximumf %13, %14 : vector<160x4xf32>
    %16 = vector.shape_cast %15 : vector<160x4xf32> to vector<10x16x4xf32>
    %17 = tpu.iota {dimensions = array<i32: 0>} : vector<10x1x1xi32>
    %c0_i32 = arith.constant 0 : i32
    %18 = arith.cmpi sgt, %arg1, %c0_i32 : i32
    %c0_i32_13 = arith.constant 0 : i32
    %19 = vector.broadcast %c0_i32_13 : i32 to vector<10x1x1xi32>
    %20 = arith.cmpi sgt, %17, %19 : vector<10x1x1xi32>
    %21 = vector.broadcast %18 : i1 to vector<10x1x1xi1>
    %22 = arith.ori %21, %20 : vector<10x1x1xi1>
    %c1_i32 = arith.constant 1 : i32
    %23 = arith.cmpi slt, %arg1, %c1_i32 : i32
    %c9_i32 = arith.constant 9 : i32
    %24 = vector.broadcast %c9_i32 : i32 to vector<10x1x1xi32>
    %25 = arith.cmpi slt, %17, %24 : vector<10x1x1xi32>
    %26 = vector.broadcast %23 : i1 to vector<10x1x1xi1>
    %27 = arith.ori %26, %25 : vector<10x1x1xi1>
    %28 = arith.andi %22, %27 : vector<10x1x1xi1>
    %cst_14 = arith.constant 0.000000e+00 : f32
    %29 = vector.shape_cast %28 : vector<10x1x1xi1> to vector<10x1x1xi1>
    %30 = vector.broadcast %29 : vector<10x1x1xi1> to vector<10x16x4xi1>
    %31 = vector.broadcast %cst_14 : f32 to vector<10x16x4xf32>
    %32 = arith.select %30, %16, %31 : vector<10x16x4xi1>, vector<10x16x4xf32>
    %33 = arith.truncf %32 : vector<10x16x4xf32> to vector<10x16x4xbf16>
    %c0_i32_15 = arith.constant 0 : i32
    %34 = arith.sitofp %c0_i32_15 : i32 to bf16
    %35 = vector.broadcast %34 : bf16 to vector<10x1x4xbf16>
    %36 = tpu.concatenate %35, %33 in 1 : vector<10x1x4xbf16>, vector<10x16x4xbf16> -> vector<10x17x4xbf16>
    %37 = vector.broadcast %34 : bf16 to vector<10x1x4xbf16>
    %38 = tpu.concatenate %36, %37 in 1 : vector<10x17x4xbf16>, vector<10x1x4xbf16> -> vector<10x18x4xbf16>
    %cst_16 = arith.constant 0.000000e+00 : f32
    %39 = vector.broadcast %cst_16 : f32 to vector<128x4xf32>
    %40 = vector.extract_strided_slice %38 {offsets = [0, 0, 0], sizes = [8, 18, 4], strides = [1, 1, 1]} : vector<10x18x4xbf16> to vector<8x18x4xbf16>
    %41 = vector.extract_strided_slice %40 {offsets = [0, 0, 0], sizes = [8, 16, 4], strides = [1, 1, 1]} : vector<8x18x4xbf16> to vector<8x16x4xbf16>
    %42 = vector.extract_strided_slice %40 {offsets = [0, 1, 0], sizes = [8, 16, 4], strides = [1, 1, 1]} : vector<8x18x4xbf16> to vector<8x16x4xbf16>
    %43 = vector.extract_strided_slice %40 {offsets = [0, 2, 0], sizes = [8, 16, 4], strides = [1, 1, 1]} : vector<8x18x4xbf16> to vector<8x16x4xbf16>
    %44 = tpu.concatenate %41, %42, %43 in 2 : vector<8x16x4xbf16>, vector<8x16x4xbf16>, vector<8x16x4xbf16> -> vector<8x16x12xbf16>
    %45 = vector.shape_cast %44 : vector<8x16x12xbf16> to vector<128x12xbf16>
    %c0_17 = arith.constant 0 : index
    %c0_18 = arith.constant 0 : index
    %c0_19 = arith.constant 0 : index
    %46 = vector.load %arg5[%c0_17, %c0_18, %c0_19] : memref<3x12x4xbf16, #tpu.memory_space<vmem>>, vector<1x12x4xbf16>
    %47 = vector.shape_cast %46 : vector<1x12x4xbf16> to vector<12x4xbf16>
    %cst_20 = arith.constant dense<0.000000e+00> : vector<128x4xf32>
    %48 = tpu.matmul %45, %47, %cst_20 {dimension_numbers = #tpu.dot_dimension_numbers<[1], [0], [0], [1], [0, 0, 1, 1], [], []>} : vector<128x12xbf16>, vector<12x4xbf16>, vector<128x4xf32> -> vector<128x4xf32>
    %49 = arith.addf %39, %48 : vector<128x4xf32>
    %50 = vector.extract_strided_slice %38 {offsets = [1, 0, 0], sizes = [8, 18, 4], strides = [1, 1, 1]} : vector<10x18x4xbf16> to vector<8x18x4xbf16>
    %51 = vector.extract_strided_slice %50 {offsets = [0, 0, 0], sizes = [8, 16, 4], strides = [1, 1, 1]} : vector<8x18x4xbf16> to vector<8x16x4xbf16>
    %52 = vector.extract_strided_slice %50 {offsets = [0, 1, 0], sizes = [8, 16, 4], strides = [1, 1, 1]} : vector<8x18x4xbf16> to vector<8x16x4xbf16>
    %53 = vector.extract_strided_slice %50 {offsets = [0, 2, 0], sizes = [8, 16, 4], strides = [1, 1, 1]} : vector<8x18x4xbf16> to vector<8x16x4xbf16>
    %54 = tpu.concatenate %51, %52, %53 in 2 : vector<8x16x4xbf16>, vector<8x16x4xbf16>, vector<8x16x4xbf16> -> vector<8x16x12xbf16>
    %55 = vector.shape_cast %54 : vector<8x16x12xbf16> to vector<128x12xbf16>
    %c1 = arith.constant 1 : index
    %c0_21 = arith.constant 0 : index
    %c0_22 = arith.constant 0 : index
    %56 = vector.load %arg5[%c1, %c0_21, %c0_22] : memref<3x12x4xbf16, #tpu.memory_space<vmem>>, vector<1x12x4xbf16>
    %57 = vector.shape_cast %56 : vector<1x12x4xbf16> to vector<12x4xbf16>
    %cst_23 = arith.constant dense<0.000000e+00> : vector<128x4xf32>
    %58 = tpu.matmul %55, %57, %cst_23 {dimension_numbers = #tpu.dot_dimension_numbers<[1], [0], [0], [1], [0, 0, 1, 1], [], []>} : vector<128x12xbf16>, vector<12x4xbf16>, vector<128x4xf32> -> vector<128x4xf32>
    %59 = arith.addf %49, %58 : vector<128x4xf32>
    %60 = vector.extract_strided_slice %38 {offsets = [2, 0, 0], sizes = [8, 18, 4], strides = [1, 1, 1]} : vector<10x18x4xbf16> to vector<8x18x4xbf16>
    %61 = vector.extract_strided_slice %60 {offsets = [0, 0, 0], sizes = [8, 16, 4], strides = [1, 1, 1]} : vector<8x18x4xbf16> to vector<8x16x4xbf16>
    %62 = vector.extract_strided_slice %60 {offsets = [0, 1, 0], sizes = [8, 16, 4], strides = [1, 1, 1]} : vector<8x18x4xbf16> to vector<8x16x4xbf16>
    %63 = vector.extract_strided_slice %60 {offsets = [0, 2, 0], sizes = [8, 16, 4], strides = [1, 1, 1]} : vector<8x18x4xbf16> to vector<8x16x4xbf16>
    %64 = tpu.concatenate %61, %62, %63 in 2 : vector<8x16x4xbf16>, vector<8x16x4xbf16>, vector<8x16x4xbf16> -> vector<8x16x12xbf16>
    %65 = vector.shape_cast %64 : vector<8x16x12xbf16> to vector<128x12xbf16>
    %c2 = arith.constant 2 : index
    %c0_24 = arith.constant 0 : index
    %c0_25 = arith.constant 0 : index
    %66 = vector.load %arg5[%c2, %c0_24, %c0_25] : memref<3x12x4xbf16, #tpu.memory_space<vmem>>, vector<1x12x4xbf16>
    %67 = vector.shape_cast %66 : vector<1x12x4xbf16> to vector<12x4xbf16>
    %cst_26 = arith.constant dense<0.000000e+00> : vector<128x4xf32>
    %68 = tpu.matmul %65, %67, %cst_26 {dimension_numbers = #tpu.dot_dimension_numbers<[1], [0], [0], [1], [0, 0, 1, 1], [], []>} : vector<128x12xbf16>, vector<12x4xbf16>, vector<128x4xf32> -> vector<128x4xf32>
    %69 = arith.addf %59, %68 : vector<128x4xf32>
    %c0_27 = arith.constant 0 : index
    %c0_28 = arith.constant 0 : index
    %70 = vector.load %arg8[%c0_27, %c0_28] : memref<1x4xf32, #tpu.memory_space<vmem>>, vector<1x4xf32>
    %71 = vector.broadcast %70 : vector<1x4xf32> to vector<128x4xf32>
    %72 = arith.addf %69, %71 : vector<128x4xf32>
    %cst_29 = arith.constant 0.000000e+00 : f32
    %73 = vector.broadcast %cst_29 : f32 to vector<128x4xf32>
    %74 = arith.maximumf %72, %73 : vector<128x4xf32>
    %75 = arith.truncf %74 : vector<128x4xf32> to vector<128x4xbf16>
    %c0_30 = arith.constant 0 : index
    %c0_31 = arith.constant 0 : index
    %76 = vector.load %arg6[%c0_30, %c0_31] : memref<4x16xbf16, #tpu.memory_space<vmem>>, vector<4x16xbf16>
    %cst_32 = arith.constant dense<0.000000e+00> : vector<128x16xf32>
    %77 = tpu.matmul %75, %76, %cst_32 {dimension_numbers = #tpu.dot_dimension_numbers<[1], [0], [0], [1], [0, 0, 1, 1], [], []>} : vector<128x4xbf16>, vector<4x16xbf16>, vector<128x16xf32> -> vector<128x16xf32>
    %c0_33 = arith.constant 0 : index
    %c0_34 = arith.constant 0 : index
    %78 = vector.load %arg9[%c0_33, %c0_34] : memref<1x16xf32, #tpu.memory_space<vmem>>, vector<1x16xf32>
    %79 = vector.broadcast %78 : vector<1x16xf32> to vector<128x16xf32>
    %80 = arith.addf %77, %79 : vector<128x16xf32>
    %c0_35 = arith.constant 0 : index
    %c0_36 = arith.constant 0 : index
    %c0_37 = arith.constant 0 : index
    %c0_38 = arith.constant 0 : index
    %81 = vector.load %arg2[%c0_35, %c0_36, %c0_37, %c0_38] : memref<1x8x16x16xf32, #tpu.memory_space<vmem>>, vector<1x8x16x16xf32>
    %82 = vector.shape_cast %81 : vector<1x8x16x16xf32> to vector<8x16x16xf32>
    %83 = vector.shape_cast %82 : vector<8x16x16xf32> to vector<128x16xf32>
    %84 = arith.addf %80, %83 : vector<128x16xf32>
    %cst_39 = arith.constant 0.000000e+00 : f32
    %85 = vector.broadcast %cst_39 : f32 to vector<128x16xf32>
    %86 = arith.maximumf %84, %85 : vector<128x16xf32>
    %87 = vector.shape_cast %86 : vector<128x16xf32> to vector<8x16x16xf32>
    %c0_40 = arith.constant 0 : index
    %c0_41 = arith.constant 0 : index
    %c0_42 = arith.constant 0 : index
    %c0_43 = arith.constant 0 : index
    %88 = vector.load %arg10[%c0_40, %c0_41, %c0_42, %c0_43] : memref<1x8x16x16xf32, #tpu.memory_space<vmem>>, vector<1x8x16x16xf32>
    %89 = vector.shape_cast %88 : vector<1x8x16x16xf32> to vector<8x16x16xf32>
    %90 = vector.shape_cast %87 : vector<8x16x16xf32> to vector<1x8x16x16xf32>
    tpu.vector_store %arg10[%c0_40, %c0_41, %c0_42, %c0_43], %90 {strides = array<i32>} : memref<1x8x16x16xf32, #tpu.memory_space<vmem>>, vector<1x8x16x16xf32>,
    return
  }
  func.func @transform_0(%arg0: i32, %arg1: i32) -> (i32, i32, i32, i32) {
    %c0_i32 = arith.constant 0 : i32
    %c0_i32_0 = arith.constant 0 : i32
    %c0_i32_1 = arith.constant 0 : i32
    return %arg0, %arg1, %c0_i32, %c0_i32_0 : i32, i32, i32, i32
  }
  func.func @transform_1(%arg0: i32, %arg1: i32) -> (i32, i32, i32, i32, i32) {
    %c0_i32 = arith.constant 0 : i32
    %c0_i32_0 = arith.constant 0 : i32
    %c0_i32_1 = arith.constant 0 : i32
    %c0_i32_2 = arith.constant 0 : i32
    return %arg0, %arg1, %c0_i32, %c0_i32_0, %c0_i32_1 : i32, i32, i32, i32, i32
  }
  func.func @transform_2(%arg0: i32, %arg1: i32) -> (i32, i32) {
    %c0_i32 = arith.constant 0 : i32
    %c0_i32_0 = arith.constant 0 : i32
    %c0_i32_1 = arith.constant 0 : i32
    return %c0_i32, %c0_i32_0 : i32, i32
  }
  func.func @transform_3(%arg0: i32, %arg1: i32) -> (i32, i32, i32) {
    %c0_i32 = arith.constant 0 : i32
    %c0_i32_0 = arith.constant 0 : i32
    %c0_i32_1 = arith.constant 0 : i32
    %c0_i32_2 = arith.constant 0 : i32
    return %c0_i32, %c0_i32_0, %c0_i32_1 : i32, i32, i32
  }
  func.func @transform_4(%arg0: i32, %arg1: i32) -> (i32, i32) {
    %c0_i32 = arith.constant 0 : i32
    %c0_i32_0 = arith.constant 0 : i32
    %c0_i32_1 = arith.constant 0 : i32
    return %c0_i32, %c0_i32_0 : i32, i32
  }
  func.func @transform_5(%arg0: i32, %arg1: i32) -> (i32, i32) {
    %c0_i32 = arith.constant 0 : i32
    %c0_i32_0 = arith.constant 0 : i32
    %c0_i32_1 = arith.constant 0 : i32
    return %c0_i32, %c0_i32_0 : i32, i32
  }
  func.func @transform_6(%arg0: i32, %arg1: i32) -> (i32, i32) {
    %c0_i32 = arith.constant 0 : i32
    %c0_i32_0 = arith.constant 0 : i32
    %c0_i32_1 = arith.constant 0 : i32
    return %c0_i32, %c0_i32_0 : i32, i32
  }
  func.func @transform_7(%arg0: i32, %arg1: i32) -> (i32, i32) {
    %c0_i32 = arith.constant 0 : i32
    %c0_i32_0 = arith.constant 0 : i32
    %c0_i32_1 = arith.constant 0 : i32
    return %c0_i32, %c0_i32_0 : i32, i32
  }
  func.func @transform_8(%arg0: i32, %arg1: i32) -> (i32, i32, i32, i32) {
    %c0_i32 = arith.constant 0 : i32
    %c0_i32_0 = arith.constant 0 : i32
    %c0_i32_1 = arith.constant 0 : i32
    return %arg0, %arg1, %c0_i32, %c0_i32_0 : i32, i32, i32, i32
  }
}

</mosaic_0001>

<llo_original>
// kernel: tpu_custom_call.1
$region0: #{tpu_custom_call.1}
  #allocation0 [shape = 'u32[]', space=smem, size = 0x4, offset = 0x4, fixed_abs, tag = 'smem constant byte address 0x4 - core index']
  #allocation1 [shape = 'u32[72,128]{1,0:T(1,128)}', space=vmem, size = 0x9000, scoped, tag = 'internal scratch']
  %s0 = inlined_call_operand.hbm [shape: f32[2,16,16,16], index: 0, kind: input, shape index: {}]
  %s1 = inlined_call_operand.hbm [shape: f32[2,2,2,16,16], index: 1, kind: input, shape index: {}]
  %s2 = inlined_call_operand.vmem [shape: bf16[16,4], index: 2, kind: input, shape index: {}]
  %s3 = inlined_call_operand.vmem [shape: bf16[3,12,4], index: 3, kind: input, shape index: {}]
  %s4 = inlined_call_operand.vmem [shape: bf16[4,16], index: 4, kind: input, shape index: {}]
  %s5 = inlined_call_operand.vmem [shape: f32[1,4], index: 5, kind: input, shape index: {}]
  %s6 = inlined_call_operand.vmem [shape: f32[1,4], index: 6, kind: input, shape index: {}]
  %s7 = inlined_call_operand.vmem [shape: f32[1,16], index: 7, kind: input, shape index: {}]
  %s8 = inlined_call_operand.hbm [shape: f32[2,16,16,16], index: 8, kind: output, shape index: {}]
  %s9 = sld [smem:[#allocation0]]
  $region73: #{tpu_custom_call.1} parent=0
    _
  %s11 = ssub.s32 1, %s9
  %s12 = scalar_select 0, %s11, %s9
  $region1: #{tpu_custom_call.1} parent=0
    #allocation2 [shape = 'u8[131072]{0}', space=vmem, size = 0x20000, scoped, tag = 'input window, operand 0']
    #allocation3 [shape = 's32[2]{0}', space=sflag, size = 0x8, scoped, tag = 'scoped memory for tpu_custom_call.1']
    #allocation4 [shape = 's32[2]{0}', space=sflag, size = 0x8, scoped, tag = 'scoped memory for tpu_custom_call.1']
    #allocation5 [shape = 'u8[32768]{0}', space=vmem, size = 0x8000, scoped, tag = 'input window, operand 1']
    #allocation6 [shape = 's32[2]{0}', space=sflag, size = 0x8, scoped, tag = 'scoped memory for tpu_custom_call.1']
    #allocation7 [shape = 'u8[131072]{0}', space=vmem, size = 0x20000, scoped, tag = 'output window, operand 0']
    %13 = vsyncpa [#allocation3], 0
    %s14 = scalar_lea.sflag [#allocation3], 1
    %15 = vsyncpa %s14, 0
    %16 = vsyncpa [#allocation6], 0
    %s17 = scalar_lea.sflag [#allocation6], 1
    %18 = vsyncpa %s17, 0
    %19 = vsyncpa [#allocation4], 0
    %s20 = scalar_lea.sflag [#allocation4], 1
    %21 = vsyncpa %s20, 0
    loop: start=0, step=1, limit=6
    $region2: #{tpu_custom_call.1} parent=1 // loop_pre_header
      _
    $region3: #{tpu_custom_call.1} parent=1 // loop_header
      %s23 = sphi 0, %s27
      %p24 = scmp.ge.s32.totalorder %s23, 6
      %s30 = sphi 0, %s42
      %s31 = sphi 0, %s38
      %s32 = sphi 0, %s30
      %s33 = sphi 0, %s31
      %s34 = sphi 0, %s32
      %s35 = sphi 0, %s33
      %s47 = sphi 0, %s49
      %s50 = sphi 0, %s47
      %s51 = sphi 0, %s50
      %s67 = sphi 0, %s51
      %s75 = sphi 0, %s77
      %s78 = sphi 0, %s75
      %s79 = sphi 0, %s78
      %s95 = sphi 0, %s79
      %s99 = sphi 0, %s99
      %s101 = sphi 0, %s99
      %s102 = sphi 0, %s101
      %s116 = sphi 0, %s102
      %s120 = sphi 0, %s120
      %s122 = sphi 0, %s120
      %s123 = sphi 0, %s122
      %s137 = sphi 0, %s123
      %s141 = sphi 0, %s141
      %s143 = sphi 0, %s141
      %s144 = sphi 0, %s143
      %s158 = sphi 0, %s144
      %s162 = sphi 0, %s162
      %s164 = sphi 0, %s162
      %s165 = sphi 0, %s164
      %s179 = sphi 0, %s165
      %s183 = sphi 0, %s183
      %s185 = sphi 0, %s183
      %s186 = sphi 0, %s185
      %s200 = sphi 0, %s186
      %s204 = sphi 0, %s204
      %s206 = sphi 0, %s204
      %s207 = sphi 0, %s206
      %s221 = sphi 0, %s207
      %s229 = sphi 0, %s231
      %s232 = sphi 0, %s229
      %s233 = sphi 0, %s232
      %s249 = sphi 0, %s233
    $region4: #{tpu_custom_call.1} parent=1 // loop_header_branch
      %26 = sbr.rel (%p24) target = $region8
    $region5: #{tpu_custom_call.1} parent=1 // loop_body
      %s28 = ssub.s32 %s23, 1
      %s29 = ssub.s32 %s23, 2
      %s36 = sadd.s32 1, %s31
      %p37 = scmp.ge.s32.totalorder %s36, 2
      %s38 = scalar_select %p37, 0, %s36
      %s39 = sadd.s32 1, %s30
      %s40 = scalar_select %p37, %s39, %s30
      %p41 = scmp.ge.s32.totalorder %s40, 2
      %s42 = scalar_select %p41, 0, %s40
      %s43 = ssub.s32 %s30, %s42
      %s44 = ssub.s32 %s31, %s38
      %s45 = sor.u32 %s43, %s44
      %p46 = scmp.eq.s32.totalorder %s45, 0
      %s48 = sadd.s32 %s47, 1
      %s49 = scalar_select %p46, %s47, %s48
      %p52 = pneg %p46
      %p53 = scmp.eq.s32.totalorder %s23, 3
      %p54 = por %p52, %p53
      %p55 = scmp.ne.s32.totalorder %s47, %s50
      %p56 = scmp.eq.s32.totalorder %s23, 0
      %p57 = por %p55, %p56
      %p58 = scmp.ne.s32.totalorder %s47, %s50
      %p59 = scmp.eq.s32.totalorder %s28, 3
      %p60 = por %p58, %p59
      %p61 = scmp.ne.s32.totalorder %s50, %s51
      %p62 = scmp.eq.s32.totalorder %s28, 0
      %p63 = por %p61, %p62
      %p64 = scmp.ne.s32.totalorder %s50, %s51
      %p65 = scmp.eq.s32.totalorder %s29, 3
      %p66 = por %p64, %p65
      %p68 = scmp.ne.s32.totalorder %s51, %s67
      %p69 = scmp.eq.s32.totalorder %s29, 0
      %p70 = por %p68, %p69
      %s71 = ssub.s32 %s30, %s42
      %s72 = ssub.s32 %s31, %s38
      %s73 = sor.u32 %s71, %s72
      %p74 = scmp.eq.s32.totalorder %s73, 0
      %s76 = sadd.s32 %s75, 1
      %s77 = scalar_select %p74, %s75, %s76
      %p80 = pneg %p74
      %p81 = scmp.eq.s32.totalorder %s23, 3
      %p82 = por %p80, %p81
      %p83 = scmp.ne.s32.totalorder %s75, %s78
      %p84 = scmp.eq.s32.totalorder %s23, 0
      %p85 = por %p83, %p84
      %p86 = scmp.ne.s32.totalorder %s75, %s78
      %p87 = scmp.eq.s32.totalorder %s28, 3
      %p88 = por %p86, %p87
      %p89 = scmp.ne.s32.totalorder %s78, %s79
      %p90 = scmp.eq.s32.totalorder %s28, 0
      %p91 = por %p89, %p90
      %p92 = scmp.ne.s32.totalorder %s78, %s79
      %p93 = scmp.eq.s32.totalorder %s29, 3
      %p94 = por %p92, %p93
      %p96 = scmp.ne.s32.totalorder %s79, %s95
      %p97 = scmp.eq.s32.totalorder %s29, 0
      %p98 = por %p96, %p97
      %s100 = sadd.s32 %s99, 1
      %p103 = scmp.eq.s32.totalorder %s23, 3
      %p104 = scmp.ne.s32.totalorder %s99, %s101
      %p105 = scmp.eq.s32.totalorder %s23, 0
      %p106 = por %p104, %p105
      %p107 = scmp.ne.s32.totalorder %s99, %s101
      %p108 = scmp.eq.s32.totalorder %s28, 3
      %p109 = por %p107, %p108
      %p110 = scmp.ne.s32.totalorder %s101, %s102
      %p111 = scmp.eq.s32.totalorder %s28, 0
      %p112 = por %p110, %p111
      %p113 = scmp.ne.s32.totalorder %s101, %s102
      %p114 = scmp.eq.s32.totalorder %s29, 3
      %p115 = por %p113, %p114
      %p117 = scmp.ne.s32.totalorder %s102, %s116
      %p118 = scmp.eq.s32.totalorder %s29, 0
      %p119 = por %p117, %p118
      %s121 = sadd.s32 %s120, 1
      %p124 = scmp.eq.s32.totalorder %s23, 3
      %p125 = scmp.ne.s32.totalorder %s120, %s122
      %p126 = scmp.eq.s32.totalorder %s23, 0
      %p127 = por %p125, %p126
      %p128 = scmp.ne.s32.totalorder %s120, %s122
      %p129 = scmp.eq.s32.totalorder %s28, 3
      %p130 = por %p128, %p129
      %p131 = scmp.ne.s32.totalorder %s122, %s123
      %p132 = scmp.eq.s32.totalorder %s28, 0
      %p133 = por %p131, %p132
      %p134 = scmp.ne.s32.totalorder %s122, %s123
      %p135 = scmp.eq.s32.totalorder %s29, 3
      %p136 = por %p134, %p135
      %p138 = scmp.ne.s32.totalorder %s123, %s137
      %p139 = scmp.eq.s32.totalorder %s29, 0
      %p140 = por %p138, %p139
      %s142 = sadd.s32 %s141, 1
      %p145 = scmp.eq.s32.totalorder %s23, 3
      %p146 = scmp.ne.s32.totalorder %s141, %s143
      %p147 = scmp.eq.s32.totalorder %s23, 0
      %p148 = por %p146, %p147
      %p149 = scmp.ne.s32.totalorder %s141, %s143
      %p150 = scmp.eq.s32.totalorder %s28, 3
      %p151 = por %p149, %p150
      %p152 = scmp.ne.s32.totalorder %s143, %s144
      %p153 = scmp.eq.s32.totalorder %s28, 0
      %p154 = por %p152, %p153
      %p155 = scmp.ne.s32.totalorder %s143, %s144
      %p156 = scmp.eq.s32.totalorder %s29, 3
      %p157 = por %p155, %p156
      %p159 = scmp.ne.s32.totalorder %s144, %s158
      %p160 = scmp.eq.s32.totalorder %s29, 0
      %p161 = por %p159, %p160
      %s163 = sadd.s32 %s162, 1
      %p166 = scmp.eq.s32.totalorder %s23, 3
      %p167 = scmp.ne.s32.totalorder %s162, %s164
      %p168 = scmp.eq.s32.totalorder %s23, 0
      %p169 = por %p167, %p168
      %p170 = scmp.ne.s32.totalorder %s162, %s164
      %p171 = scmp.eq.s32.totalorder %s28, 3
      %p172 = por %p170, %p171
      %p173 = scmp.ne.s32.totalorder %s164, %s165
      %p174 = scmp.eq.s32.totalorder %s28, 0
      %p175 = por %p173, %p174
      %p176 = scmp.ne.s32.totalorder %s164, %s165
      %p177 = scmp.eq.s32.totalorder %s29, 3
      %p178 = por %p176, %p177
      %p180 = scmp.ne.s32.totalorder %s165, %s179
      %p181 = scmp.eq.s32.totalorder %s29, 0
      %p182 = por %p180, %p181
      %s184 = sadd.s32 %s183, 1
      %p187 = scmp.eq.s32.totalorder %s23, 3
      %p188 = scmp.ne.s32.totalorder %s183, %s185
      %p189 = scmp.eq.s32.totalorder %s23, 0
      %p190 = por %p188, %p189
      %p191 = scmp.ne.s32.totalorder %s183, %s185
      %p192 = scmp.eq.s32.totalorder %s28, 3
      %p193 = por %p191, %p192
      %p194 = scmp.ne.s32.totalorder %s185, %s186
      %p195 = scmp.eq.s32.totalorder %s28, 0
      %p196 = por %p194, %p195
      %p197 = scmp.ne.s32.totalorder %s185, %s186
      %p198 = scmp.eq.s32.totalorder %s29, 3
      %p199 = por %p197, %p198
      %p201 = scmp.ne.s32.totalorder %s186, %s200
      %p202 = scmp.eq.s32.totalorder %s29, 0
      %p203 = por %p201, %p202
      %s205 = sadd.s32 %s204, 1
      %p208 = scmp.eq.s32.totalorder %s23, 3
      %p209 = scmp.ne.s32.totalorder %s204, %s206
      %p210 = scmp.eq.s32.totalorder %s23, 0
      %p211 = por %p209, %p210
      %p212 = scmp.ne.s32.totalorder %s204, %s206
      %p213 = scmp.eq.s32.totalorder %s28, 3
      %p214 = por %p212, %p213
      %p215 = scmp.ne.s32.totalorder %s206, %s207
      %p216 = scmp.eq.s32.totalorder %s28, 0
      %p217 = por %p215, %p216
      %p218 = scmp.ne.s32.totalorder %s206, %s207
      %p219 = scmp.eq.s32.totalorder %s29, 3
      %p220 = por %p218, %p219
      %p222 = scmp.ne.s32.totalorder %s207, %s221
      %p223 = scmp.eq.s32.totalorder %s29, 0
      %p224 = por %p222, %p223
      %s225 = ssub.s32 %s30, %s42
      %s226 = ssub.s32 %s31, %s38
      %s227 = sor.u32 %s225, %s226
      %p228 = scmp.eq.s32.totalorder %s227, 0
      %s230 = sadd.s32 %s229, 1
      %s231 = scalar_select %p228, %s229, %s230
      %p234 = pneg %p228
      %p235 = scmp.eq.s32.totalorder %s23, 3
      %p236 = por %p234, %p235
      %p237 = scmp.ne.s32.totalorder %s229, %s232
      %p238 = scmp.eq.s32.totalorder %s23, 0
      %p239 = por %p237, %p238
      %p240 = scmp.ne.s32.totalorder %s229, %s232
      %p241 = scmp.eq.s32.totalorder %s28, 3
      %p242 = por %p240, %p241
      %p243 = scmp.ne.s32.totalorder %s232, %s233
      %p244 = scmp.eq.s32.totalorder %s28, 0
      %p245 = por %p243, %p244
      %p246 = scmp.ne.s32.totalorder %s232, %s233
      %p247 = scmp.eq.s32.totalorder %s29, 3
      %p248 = por %p246, %p247
      %p250 = scmp.ne.s32.totalorder %s233, %s249
      %p251 = scmp.eq.s32.totalorder %s29, 0
      %p252 = por %p250, %p251
      %p253 = scmp.le.s32.totalorder 1, %s23
      %p254 = scmp.lt.s32.totalorder %s23, 5
      %p255 = pnand %p253, %p254
      %p256 = pneg %p255
      // Predicated region
      $region9: #{tpu_custom_call.1} parent=5 // pred_check
        _
      $region10: #{tpu_custom_call.1} parent=5 // pred_check_branch
        %258 = sbr.rel (%p255) target = $region12
      $region11: #{tpu_custom_call.1} parent=5 // pred_region
        %s259 = ssub.s32 %s23, 1
        // Predicated region
        $region13: #{tpu_custom_call.1} parent=11 // pred_check
          %p260 = pneg %p112
        $region14: #{tpu_custom_call.1} parent=11 // pred_check_branch
          %262 = sbr.rel (%p260) target = $region16
        $region15: #{tpu_custom_call.1} parent=11 // pred_region
          _
        $region16: #{tpu_custom_call.1} parent=11 // pred_fallthru
          _
        // Predicated region
        $region17: #{tpu_custom_call.1} parent=11 // pred_check
          %p263 = pneg %p133
        $region18: #{tpu_custom_call.1} parent=11 // pred_check_branch
          %265 = sbr.rel (%p263) target = $region20
        $region19: #{tpu_custom_call.1} parent=11 // pred_region
          _
        $region20: #{tpu_custom_call.1} parent=11 // pred_fallthru
          _
        // Predicated region
        $region21: #{tpu_custom_call.1} parent=11 // pred_check
          %p266 = pneg %p154
        $region22: #{tpu_custom_call.1} parent=11 // pred_check_branch
          %268 = sbr.rel (%p266) target = $region24
        $region23: #{tpu_custom_call.1} parent=11 // pred_region
          _
        $region24: #{tpu_custom_call.1} parent=11 // pred_fallthru
          _
        // Predicated region
        $region25: #{tpu_custom_call.1} parent=11 // pred_check
          %p269 = pneg %p175
        $region26: #{tpu_custom_call.1} parent=11 // pred_check_branch
          %271 = sbr.rel (%p269) target = $region28
        $region27: #{tpu_custom_call.1} parent=11 // pred_region
          _
        $region28: #{tpu_custom_call.1} parent=11 // pred_fallthru
          _
        // Predicated region
        $region29: #{tpu_custom_call.1} parent=11 // pred_check
          %p272 = pneg %p196
        $region30: #{tpu_custom_call.1} parent=11 // pred_check_branch
          %274 = sbr.rel (%p272) target = $region32
        $region31: #{tpu_custom_call.1} parent=11 // pred_region
          _
        $region32: #{tpu_custom_call.1} parent=11 // pred_fallthru
          _
        // Predicated region
        $region33: #{tpu_custom_call.1} parent=11 // pred_check
          %p275 = pneg %p217
        $region34: #{tpu_custom_call.1} parent=11 // pred_check_branch
          %277 = sbr.rel (%p275) target = $region36
        $region35: #{tpu_custom_call.1} parent=11 // pred_region
          _
        $region36: #{tpu_custom_call.1} parent=11 // pred_fallthru
          _
      $region12: #{tpu_custom_call.1} parent=5 // pred_fallthru
        _
      %p278 = scmp.lt.s32.totalorder %s23, 4
      // Predicated region
      $region37: #{tpu_custom_call.1} parent=5 // pred_check
        %p279 = pneg %p278
      $region38: #{tpu_custom_call.1} parent=5 // pred_check_branch
        %281 = sbr.rel (%p279) target = $region40
      $region39: #{tpu_custom_call.1} parent=5 // pred_region
        // Predicated region
        $region41: #{tpu_custom_call.1} parent=39 // pred_check
          %p282 = pneg %p57
        $region42: #{tpu_custom_call.1} parent=39 // pred_check_branch
          %284 = sbr.rel (%p282) target = $region44
        $region43: #{tpu_custom_call.1} parent=39 // pred_region
          %s285 = sand.u32 %s47, 1
          %s286 = scalar_lea.sflag [#allocation3], %s285
          %s287 = sand.u32 %s47, 1
          %s288 = smul.addr %s287, 128
          %s289 = scalar_lea.vmem [#allocation2], %s288
          %s290 = smul.u32 8, %s31
          %292 = vsyncadd %s286, 0
          %s293 = smul.addr %s290, 2
          %s294 = smul.addr %s30, 32
          %s295 = sadd.s32 %s293, %s294
          %s296 = smul.addr %s295, 8
          %s297 = scalar_lea.hbm %s0, %s296
          %s298 = sshll.u32 %s297, 4
          %s299 = int_to_ptr.hbm [resolvable:$true] %s298
          %s300 = sshll.u32 %s289, 4
          %s301 = int_to_ptr.vmem [resolvable:$true] %s300
          %306 = dma.hbm_to_vmem [thread:$0]  %s299, 2048, %s301, %s286, 128, 128, 8
        $region44: #{tpu_custom_call.1} parent=39 // pred_fallthru
          _
        // Predicated region
        $region45: #{tpu_custom_call.1} parent=39 // pred_check
          %p307 = pneg %p85
        $region46: #{tpu_custom_call.1} parent=39 // pred_check_branch
          %309 = sbr.rel (%p307) target = $region48
        $region47: #{tpu_custom_call.1} parent=39 // pred_region
          %s310 = sand.u32 %s75, 1
          %s311 = scalar_lea.sflag [#allocation6], %s310
          %s312 = sand.u32 %s75, 1
          %s313 = smul.addr %s312, 32
          %s314 = scalar_lea.vmem [#allocation5], %s313
          %316 = vsyncadd %s311, 0
          %s317 = smul.addr %s31, 4
          %s318 = smul.addr %s30, 8
          %s319 = sadd.s32 %s317, %s318
          %s320 = smul.addr %s319, 8
          %s321 = scalar_lea.hbm %s1, %s320
          %s322 = sshll.u32 %s321, 4
          %s323 = int_to_ptr.hbm [resolvable:$true] %s322
          %s324 = sshll.u32 %s314, 4
          %s325 = int_to_ptr.vmem [resolvable:$true] %s324
          %330 = dma.hbm_to_vmem [thread:$0]  %s323, 512, %s325, %s311, 128, 128, 8
        $region48: #{tpu_custom_call.1} parent=39 // pred_fallthru
          _
      $region40: #{tpu_custom_call.1} parent=5 // pred_fallthru
        _
      %p331 = scmp.le.s32.totalorder 1, %s23
      %p332 = scmp.lt.s32.totalorder %s23, 5
      %p333 = pnand %p331, %p332
      %p334 = pneg %p333
      // Predicated region
      $region49: #{tpu_custom_call.1} parent=5 // pred_check
        _
      $region50: #{tpu_custom_call.1} parent=5 // pred_check_branch
        %336 = sbr.rel (%p333) target = $region52
      $region51: #{tpu_custom_call.1} parent=5 // pred_region
        %s337 = ssub.s32 %s23, 1
        %s338 = sand.u32 %s50, 1
        %s339 = scalar_lea.sflag [#allocation3], %s338
        %s340 = sand.u32 %s50, 1
        %s341 = smul.addr %s340, 128
        %s342 = scalar_lea.vmem [#allocation2], %s341
        // Predicated region
        $region53: #{tpu_custom_call.1} parent=51 // pred_check
          %p343 = pneg %p63
        $region54: #{tpu_custom_call.1} parent=51 // pred_check_branch
          %345 = sbr.rel (%p343) target = $region56
        $region55: #{tpu_custom_call.1} parent=51 // pred_region
          %347 = dma.done %s339, 2048
        $region56: #{tpu_custom_call.1} parent=51 // pred_fallthru
          _
        %s348 = sand.u32 %s78, 1
        %s349 = scalar_lea.sflag [#allocation6], %s348
        %s350 = sand.u32 %s78, 1
        %s351 = smul.addr %s350, 32
        %s352 = scalar_lea.vmem [#allocation5], %s351
        // Predicated region
        $region57: #{tpu_custom_call.1} parent=51 // pred_check
          %p353 = pneg %p91
        $region58: #{tpu_custom_call.1} parent=51 // pred_check_branch
          %355 = sbr.rel (%p353) target = $region60
        $region59: #{tpu_custom_call.1} parent=51 // pred_region
          %357 = dma.done %s349, 512
        $region60: #{tpu_custom_call.1} parent=51 // pred_fallthru
          _
        %s358 = sand.u32 %s50, 1
        %s359 = scalar_lea.sflag [#allocation3], %s358
        %s360 = sand.u32 %s50, 1
        %s361 = smul.addr %s360, 128
        %s362 = scalar_lea.vmem [#allocation2], %s361
        %p363 = pneg %p63
        %p364 = pneg %p60
        %s365 = sand.u32 %s78, 1
        %s366 = scalar_lea.sflag [#allocation6], %s365
        %s367 = sand.u32 %s78, 1
        %s368 = smul.addr %s367, 32
        %s369 = scalar_lea.vmem [#allocation5], %s368
        %p370 = pneg %p91
        %p371 = pneg %p88
        %p372 = pneg %p112
        %p373 = pneg %p109
        %p374 = pneg %p133
        %p375 = pneg %p130
        %p376 = pneg %p154
        %p377 = pneg %p151
        %p378 = pneg %p175
        %p379 = pneg %p172
        %p380 = pneg %p196
        %p381 = pneg %p193
        %p382 = pneg %p217
        %p383 = pneg %p214
        %p384 = pneg %p245
        %p385 = pneg %p242
        %s386 = sand.u32 %s232, 1
        %s387 = scalar_lea.sflag [#allocation4], %s386
        %s388 = sand.u32 %s232, 1
        %s389 = smul.addr %s388, 128
        %s390 = scalar_lea.vmem [#allocation7], %s389
        %s391 = smul.u32 8, %s33
        %s392 = smul.u32 8, %s33
        %v394 = vld [vmem:[%s352] sm:$0xff]
        %v395 = vld [vmem:[%s352 + $0x8] sm:$0xff]
        %v396 = vld [vmem:[%s352 + $0x10] sm:$0xff]
        %v397 = vld [vmem:[%s352 + $0x18] sm:$0xff]
        %v398 = vld [vmem:[%s342] sm:$0xff]
        %v399 = vld [vmem:[%s342 + $0x8] sm:$0xff]
        %v400 = vld [vmem:[%s342 + $0x10] sm:$0xff]
        %v401 = vld [vmem:[%s342 + $0x18] sm:$0xff]
        %v402 = vld [vmem:[%s342 + $0x20] sm:$0xff]
        %v403 = vld [vmem:[%s342 + $0x28] sm:$0xff]
        %v404 = vld [vmem:[%s342 + $0x30] sm:$0xff]
        %v405 = vld [vmem:[%s342 + $0x38] sm:$0xff]
        %v406 = vld [vmem:[%s342 + $0x40] sm:$0xff]
        %v407 = vld [vmem:[%s342 + $0x48] sm:$0xff]
        %v408 = vld [vmem:[%s342 + $0x50] sm:$0xff]
        %v409 = vld [vmem:[%s342 + $0x58] sm:$0xff]
        %v410 = vld [vmem:[%s342 + $0x60] sm:$0xff]
        %v411 = vld [vmem:[%s342 + $0x68] sm:$0xff]
        %v412 = vld [vmem:[%s342 + $0x70] sm:$0xff]
        %v413 = vld [vmem:[%s342 + $0x78] sm:$0xff]
        %v414 = vpack.c.bf16 %v395, %v394
        %v415 = vpack.c.bf16 %v399, %v398
        %v416 = vpack.c.bf16 %v401, %v400
        %v417 = vpack.c.bf16 %v403, %v402
        %v418 = vpack.c.bf16 %v405, %v404
        %v419 = vpack.c.bf16 %v407, %v406
        %v420 = vpack.c.bf16 %v409, %v408
        %v421 = vpack.c.bf16 %v411, %v410
        %v422 = vpack.c.bf16 %v413, %v412
        %v423 = vpack.c.bf16 %v397, %v396
        %v424 = vld [vmem:[%s2] sm:$0xf]
        %v425 = vld [vmem:[%s2 + $0x4] sm:$0xf]
        %v426 = vld [vmem:[%s5] sm:$0x1]
        %v428 = vperm.slane %v426, 0
        %v432 = vunpack.c.l.b16 %v424
        %v433 = vunpack.c.l.b16 %v425
        %v434 = vpack.c.b16 %v433, %v432
        %vm436 = vcmask 130048
        %v438 = vsel %vm436, %v414, 0
        %v441 = vsel %vm436, %v415, 0
        %v444 = vsel %vm436, %v416, 0
        %v447 = vsel %vm436, %v417, 0
        %v450 = vsel %vm436, %v418, 0
        %v453 = vsel %vm436, %v419, 0
        %v456 = vsel %vm436, %v420, 0
        %v459 = vsel %vm436, %v421, 0
        %v462 = vsel %vm436, %v422, 0
        %v465 = vsel %vm436, %v423, 0
        %467 = vmatpush.bf16.msra.mxu0 0
        %468 = vmatpush.bf16.msra.mxu0 0
        %469 = vmatpush.bf16.msra.mxu0 0
        %470 = vmatpush.bf16.msra.mxu0 0
        %471 = vmatpush.bf16.msra.mxu0 0
        %472 = vmatpush.bf16.msra.mxu0 0
        %473 = vmatpush.bf16.msra.mxu0 0
        %474 = vmatpush.bf16.msra.mxu0 %v434
        %475 = vmatmul.bf16.gmra.mxu0 %v438
        %v476 = vpop.f32.mrf.mxu0
        %v477 = vadd.f32 %v428, %v476
        %v478 = vpop.f32.mrf.mxu0
        %v479 = vadd.f32 %v428, %v478
        %480 = vmatmul.bf16.gmra.mxu0 %v441
        %v481 = vpop.f32.mrf.mxu0
        %v482 = vadd.f32 %v428, %v481
        %v483 = vpop.f32.mrf.mxu0
        %v484 = vadd.f32 %v428, %v483
        %485 = vmatmul.bf16.gmra.mxu0 %v444
        %v486 = vpop.f32.mrf.mxu0
        %v487 = vadd.f32 %v428, %v486
        %v488 = vpop.f32.mrf.mxu0
        %v489 = vadd.f32 %v428, %v488
        %490 = vmatmul.bf16.gmra.mxu0 %v447
        %v491 = vpop.f32.mrf.mxu0
        %v492 = vadd.f32 %v428, %v491
        %v493 = vpop.f32.mrf.mxu0
        %v494 = vadd.f32 %v428, %v493
        %495 = vmatmul.bf16.gmra.mxu0 %v450
        %v496 = vpop.f32.mrf.mxu0
        %v497 = vadd.f32 %v428, %v496
        %v498 = vpop.f32.mrf.mxu0
        %v499 = vadd.f32 %v428, %v498
        %500 = vmatmul.bf16.gmra.mxu0 %v453
        %v501 = vpop.f32.mrf.mxu0
        %v502 = vadd.f32 %v428, %v501
        %v503 = vpop.f32.mrf.mxu0
        %v504 = vadd.f32 %v428, %v503
        %505 = vmatmul.bf16.gmra.mxu0 %v456
        %v506 = vpop.f32.mrf.mxu0
        %v507 = vadd.f32 %v428, %v506
        %v508 = vpop.f32.mrf.mxu0
        %v509 = vadd.f32 %v428, %v508
        %510 = vmatmul.bf16.gmra.mxu0 %v459
        %v511 = vpop.f32.mrf.mxu0
        %v512 = vadd.f32 %v428, %v511
        %v513 = vpop.f32.mrf.mxu0
        %v514 = vadd.f32 %v428, %v513
        %515 = vmatmul.bf16.gmra.mxu0 %v462
        %v516 = vpop.f32.mrf.mxu0
        %v517 = vadd.f32 %v428, %v516
        %v518 = vpop.f32.mrf.mxu0
        %v519 = vadd.f32 %v428, %v518
        %520 = vmatmul.bf16.gmra.mxu0 %v465
        %v521 = vpop.f32.mrf.mxu0
        %v522 = vadd.f32 %v428, %v521
        %v523 = vpop.f32.mrf.mxu0
        %v524 = vadd.f32 %v428, %v523
        %525 = vdwg.mxu0
        %v526 = vmax.f32 %v477, 0.0
        %v527 = vmax.f32 %v479, 0.0
        %v528 = vmax.f32 %v482, 0.0
        %v529 = vmax.f32 %v484, 0.0
        %v530 = vmax.f32 %v487, 0.0
        %v531 = vmax.f32 %v489, 0.0
        %v532 = vmax.f32 %v492, 0.0
        %v533 = vmax.f32 %v494, 0.0
        %v534 = vmax.f32 %v497, 0.0
        %v535 = vmax.f32 %v499, 0.0
        %v536 = vmax.f32 %v502, 0.0
        %v537 = vmax.f32 %v504, 0.0
        %v538 = vmax.f32 %v507, 0.0
        %v539 = vmax.f32 %v509, 0.0
        %v540 = vmax.f32 %v512, 0.0
        %v541 = vmax.f32 %v514, 0.0
        %v542 = vmax.f32 %v517, 0.0
        %v543 = vmax.f32 %v519, 0.0
        %v544 = vmax.f32 %v522, 0.0
        %v545 = vmax.f32 %v524, 0.0
        %p546 = scmp.gt.s32.totalorder %s33, 0
        %s547 = scalar_select %p546, 1, 0
        %v548 = vstv %s547
        %vm549 = vcmp.eq.s32.totalorder %v548, 1
        %p550 = scmp.lt.s32.totalorder %s33, 1
        %s551 = scalar_select %p550, 1, 0
        %v552 = vstv %s551
        %vm553 = vcmp.eq.s32.totalorder %v552, 1
        %v554 = vsel %vm549, 1, 0
        %v555 = vsel %vm553, 1, 0
        %vm556 = vcmp.eq.s32.totalorder %v554, 1
        %vm557 = vcmp.eq.s32.totalorder %v555, 1
        %v558 = vsel %vm556, %v526, 0.0
        %v559 = vsel %vm556, %v527, 0.0
        %v560 = vsel 1, %v528, 0.0
        %v561 = vsel 1, %v529, 0.0
        %v562 = vsel 1, %v530, 0.0
        %v563 = vsel 1, %v531, 0.0
        %v564 = vsel 1, %v532, 0.0
        %v565 = vsel 1, %v533, 0.0
        %v566 = vsel 1, %v534, 0.0
        %v567 = vsel 1, %v535, 0.0
        %v568 = vsel 1, %v536, 0.0
        %v569 = vsel 1, %v537, 0.0
        %v570 = vsel 1, %v538, 0.0
        %v571 = vsel 1, %v539, 0.0
        %v572 = vsel 1, %v540, 0.0
        %v573 = vsel 1, %v541, 0.0
        %v574 = vsel 1, %v542, 0.0
        %v575 = vsel 1, %v543, 0.0
        %v576 = vsel %vm557, %v544, 0.0
        %v577 = vsel %vm557, %v545, 0.0
        %v578 = vpack.c.bf16 %v558, %v558
        %v579 = vpack.c.bf16 %v559, %v559
        %v580 = vpack.c.bf16 %v560, %v560
        %v581 = vpack.c.bf16 %v561, %v561
        %v582 = vpack.c.bf16 %v562, %v562
        %v583 = vpack.c.bf16 %v563, %v563
        %v584 = vpack.c.bf16 %v564, %v564
        %v585 = vpack.c.bf16 %v565, %v565
        %v586 = vpack.c.bf16 %v566, %v566
        %v587 = vpack.c.bf16 %v567, %v567
        %v588 = vpack.c.bf16 %v568, %v568
        %v589 = vpack.c.bf16 %v569, %v569
        %v590 = vpack.c.bf16 %v570, %v570
        %v591 = vpack.c.bf16 %v571, %v571
        %v592 = vpack.c.bf16 %v572, %v572
        %v593 = vpack.c.bf16 %v573, %v573
        %v594 = vpack.c.bf16 %v574, %v574
        %v595 = vpack.c.bf16 %v575, %v575
        %v596 = vpack.c.bf16 %v576, %v576
        %v597 = vpack.c.bf16 %v577, %v577
        %v618 = vunpack.c.l.b16 %v578
        %v619 = vunpack.c.l.b16 %v579
        %v620 = vunpack.c.l.b16 %v580
        %v621 = vunpack.c.l.b16 %v581
        %v622 = vunpack.c.l.b16 %v582
        %v623 = vunpack.c.l.b16 %v583
        %v624 = vunpack.c.l.b16 %v584
        %v625 = vunpack.c.l.b16 %v585
        %v626 = vunpack.c.l.b16 %v586
        %v627 = vunpack.c.l.b16 %v587
        %v628 = vunpack.c.l.b16 %v588
        %v629 = vunpack.c.l.b16 %v589
        %v630 = vunpack.c.l.b16 %v590
        %v631 = vunpack.c.l.b16 %v591
        %v632 = vunpack.c.l.b16 %v592
        %v633 = vunpack.c.l.b16 %v593
        %v634 = vunpack.c.l.b16 %v594
        %v635 = vunpack.c.l.b16 %v595
        %v636 = vunpack.c.l.b16 %v596
        %v637 = vunpack.c.l.b16 %v597
        %v638 = vpack.c.b16 %v619, %v618
        %v639 = vpack.c.b16 %v621, %v620
        %v640 = vpack.c.b16 %v623, %v622
        %v641 = vpack.c.b16 %v625, %v624
        %v642 = vpack.c.b16 %v627, %v626
        %v643 = vpack.c.b16 %v629, %v628
        %v644 = vpack.c.b16 %v631, %v630
        %v645 = vpack.c.b16 %v633, %v632
        %v646 = vpack.c.b16 %v635, %v634
        %v647 = vpack.c.b16 %v637, %v636
        %v649 = vshrl.u32 %v638, 16
        %v651 = vrot.slane %v649, 7
        %v652 = vshll.u32 %v638, 16
        %v654 = vor.u32 %v651, %v652
        %v656 = vshrl.u32 %v639, 16
        %v658 = vrot.slane %v656, 7
        %v659 = vshll.u32 %v639, 16
        %v661 = vor.u32 %v658, %v659
        %v663 = vshrl.u32 %v640, 16
        %v665 = vrot.slane %v663, 7
        %v666 = vshll.u32 %v640, 16
        %v668 = vor.u32 %v665, %v666
        %v670 = vshrl.u32 %v641, 16
        %v672 = vrot.slane %v670, 7
        %v673 = vshll.u32 %v641, 16
        %v675 = vor.u32 %v672, %v673
        %v677 = vshrl.u32 %v642, 16
        %v679 = vrot.slane %v677, 7
        %v680 = vshll.u32 %v642, 16
        %v682 = vor.u32 %v679, %v680
        %v684 = vshrl.u32 %v643, 16
        %v686 = vrot.slane %v684, 7
        %v687 = vshll.u32 %v643, 16
        %v689 = vor.u32 %v686, %v687
        %v691 = vshrl.u32 %v644, 16
        %v693 = vrot.slane %v691, 7
        %v694 = vshll.u32 %v644, 16
        %v696 = vor.u32 %v693, %v694
        %v698 = vshrl.u32 %v645, 16
        %v700 = vrot.slane %v698, 7
        %v701 = vshll.u32 %v645, 16
        %v703 = vor.u32 %v700, %v701
        %v705 = vshrl.u32 %v646, 16
        %v707 = vrot.slane %v705, 7
        %v708 = vshll.u32 %v646, 16
        %v710 = vor.u32 %v707, %v708
        %v712 = vshrl.u32 %v647, 16
        %v714 = vrot.slane %v712, 7
        %v715 = vshll.u32 %v647, 16
        %v717 = vor.u32 %v714, %v715
        %vm738 = vcmask 1040384
        %vm739 = vsmask.f32 256
        %vm740 = vmand %vm738, %vm739
        %v741 = vsel %vm740, 0, %v654
        %v742 = vsel %vm740, 0, %v661
        %v743 = vsel %vm740, 0, %v668
        %v744 = vsel %vm740, 0, %v675
        %v745 = vsel %vm740, 0, %v682
        %v746 = vsel %vm740, 0, %v689
        %v747 = vsel %vm740, 0, %v696
        %v748 = vsel %vm740, 0, %v703
        %v749 = vsel %vm740, 0, %v710
        %v750 = vsel %vm740, 0, %v717
        %v751 = vsel %vm740, %v651, 0
        %v752 = vsel %vm740, %v658, 0
        %v753 = vsel %vm740, %v665, 0
        %v754 = vsel %vm740, %v672, 0
        %v755 = vsel %vm740, %v679, 0
        %v756 = vsel %vm740, %v686, 0
        %v757 = vsel %vm740, %v693, 0
        %v758 = vsel %vm740, %v700, 0
        %v759 = vsel %vm740, %v707, 0
        %v760 = vsel %vm740, %v714, 0
        %vm761 = vsmask.f32 7424
        %v763 = vshrl.u32 %v741, 16
        %v765 = vshll.u32 %v741, 16
        %v767 = vrot.slane %v765, 1
        %v768 = vor.u32 %v763, %v767
        %v770 = vshll.u32 %v751, 16
        %v772 = vrot.slane %v770, 1
        %v773 = vsel %vm761, %v768, %v772
        %v775 = vshrl.u32 %v742, 16
        %v777 = vshll.u32 %v742, 16
        %v779 = vrot.slane %v777, 1
        %v780 = vor.u32 %v775, %v779
        %v782 = vshll.u32 %v752, 16
        %v784 = vrot.slane %v782, 1
        %v785 = vsel %vm761, %v780, %v784
        %v787 = vshrl.u32 %v743, 16
        %v789 = vshll.u32 %v743, 16
        %v791 = vrot.slane %v789, 1
        %v792 = vor.u32 %v787, %v791
        %v794 = vshll.u32 %v753, 16
        %v796 = vrot.slane %v794, 1
        %v797 = vsel %vm761, %v792, %v796
        %v799 = vshrl.u32 %v744, 16
        %v801 = vshll.u32 %v744, 16
        %v803 = vrot.slane %v801, 1
        %v804 = vor.u32 %v799, %v803
        %v806 = vshll.u32 %v754, 16
        %v808 = vrot.slane %v806, 1
        %v809 = vsel %vm761, %v804, %v808
        %v811 = vshrl.u32 %v745, 16
        %v813 = vshll.u32 %v745, 16
        %v815 = vrot.slane %v813, 1
        %v816 = vor.u32 %v811, %v815
        %v818 = vshll.u32 %v755, 16
        %v820 = vrot.slane %v818, 1
        %v821 = vsel %vm761, %v816, %v820
        %v823 = vshrl.u32 %v746, 16
        %v825 = vshll.u32 %v746, 16
        %v827 = vrot.slane %v825, 1
        %v828 = vor.u32 %v823, %v827
        %v830 = vshll.u32 %v756, 16
        %v832 = vrot.slane %v830, 1
        %v833 = vsel %vm761, %v828, %v832
        %v835 = vshrl.u32 %v747, 16
        %v837 = vshll.u32 %v747, 16
        %v839 = vrot.slane %v837, 1
        %v840 = vor.u32 %v835, %v839
        %v842 = vshll.u32 %v757, 16
        %v844 = vrot.slane %v842, 1
        %v845 = vsel %vm761, %v840, %v844
        %v847 = vshrl.u32 %v748, 16
        %v849 = vshll.u32 %v748, 16
        %v851 = vrot.slane %v849, 1
        %v852 = vor.u32 %v847, %v851
        %v854 = vshll.u32 %v758, 16
        %v856 = vrot.slane %v854, 1
        %v857 = vsel %vm761, %v852, %v856
        %858 = vrot.lane.b32.xlu0 %v773, 4
        %v859 = vpop.permute.xlu0 %858
        %860 = vrot.lane.b32.xlu0 %v785, 4
        %v861 = vpop.permute.xlu0 %860
        %862 = vrot.lane.b32.xlu0 %v797, 4
        %v863 = vpop.permute.xlu0 %862
        %864 = vrot.lane.b32.xlu0 %v809, 4
        %v865 = vpop.permute.xlu0 %864
        %866 = vrot.lane.b32.xlu0 %v821, 4
        %v867 = vpop.permute.xlu0 %866
        %868 = vrot.lane.b32.xlu0 %v833, 4
        %v869 = vpop.permute.xlu0 %868
        %870 = vrot.lane.b32.xlu0 %v845, 4
        %v871 = vpop.permute.xlu0 %870
        %872 = vrot.lane.b32.xlu0 %v857, 4
        %v873 = vpop.permute.xlu0 %872
        %vm890 = vcmask 1046528
        %v891 = vrot.slane %v741, 1
        %v892 = vrot.slane %v751, 1
        %v893 = vsel %vm890, %v891, %v892
        %v894 = vrot.slane %v742, 1
        %v895 = vrot.slane %v752, 1
        %v896 = vsel %vm890, %v894, %v895
        %v897 = vrot.slane %v743, 1
        %v898 = vrot.slane %v753, 1
        %v899 = vsel %vm890, %v897, %v898
        %v900 = vrot.slane %v744, 1
        %v901 = vrot.slane %v754, 1
        %v902 = vsel %vm890, %v900, %v901
        %v903 = vrot.slane %v745, 1
        %v904 = vrot.slane %v755, 1
        %v905 = vsel %vm890, %v903, %v904
        %v906 = vrot.slane %v746, 1
        %v907 = vrot.slane %v756, 1
        %v908 = vsel %vm890, %v906, %v907
        %v909 = vrot.slane %v747, 1
        %v910 = vrot.slane %v757, 1
        %v911 = vsel %vm890, %v909, %v910
        %v912 = vrot.slane %v748, 1
        %v913 = vrot.slane %v758, 1
        %v914 = vsel %vm890, %v912, %v913
        %915 = vrot.lane.b32.xlu0 %v893, 8
        %v916 = vpop.permute.xlu0 %915
        %917 = vrot.lane.b32.xlu0 %v896, 8
        %v918 = vpop.permute.xlu0 %917
        %919 = vrot.lane.b32.xlu0 %v899, 8
        %v920 = vpop.permute.xlu0 %919
        %921 = vrot.lane.b32.xlu0 %v902, 8
        %v922 = vpop.permute.xlu0 %921
        %923 = vrot.lane.b32.xlu0 %v905, 8
        %v924 = vpop.permute.xlu0 %923
        %925 = vrot.lane.b32.xlu0 %v908, 8
        %v926 = vpop.permute.xlu0 %925
        %927 = vrot.lane.b32.xlu0 %v911, 8
        %v928 = vpop.permute.xlu0 %927
        %929 = vrot.lane.b32.xlu0 %v914, 8
        %v930 = vpop.permute.xlu0 %929
        %vm931 = vcmask 31744
        %v933 = vsel %vm931, %v741, %v859
        %v935 = vsel %vm931, %v742, %v861
        %v937 = vsel %vm931, %v743, %v863
        %v939 = vsel %vm931, %v744, %v865
        %v941 = vsel %vm931, %v745, %v867
        %v943 = vsel %vm931, %v746, %v869
        %v945 = vsel %vm931, %v747, %v871
        %v947 = vsel %vm931, %v748, %v873
        %vm948 = vcmask 64512
        %v950 = vsel %vm948, %v933, %v916
        %v952 = vsel %vm948, %v935, %v918
        %v954 = vsel %vm948, %v937, %v920
        %v956 = vsel %vm948, %v939, %v922
        %v958 = vsel %vm948, %v941, %v924
        %v960 = vsel %vm948, %v943, %v926
        %v962 = vsel %vm948, %v945, %v928
        %v964 = vsel %vm948, %v947, %v930
        %v965 = vld [vmem:[%s3] sm:$0xf]
        %v966 = vld [vmem:[%s3 + $0x4] sm:$0x3]
        %v968 = vshrl.u32 %v749, 16
        %v970 = vshll.u32 %v749, 16
        %v972 = vrot.slane %v970, 1
        %v973 = vor.u32 %v968, %v972
        %v975 = vshll.u32 %v759, 16
        %v977 = vrot.slane %v975, 1
        %v978 = vsel %vm761, %v973, %v977
        %979 = vrot.lane.b32.xlu0 %v978, 4
        %v980 = vpop.permute.xlu0 %979
        %v983 = vrot.slane %v749, 1
        %v984 = vrot.slane %v759, 1
        %v985 = vsel %vm890, %v983, %v984
        %986 = vrot.lane.b32.xlu0 %v985, 8
        %v987 = vpop.permute.xlu0 %986
        %v989 = vsel %vm931, %v749, %v980
        %v991 = vsel %vm948, %v989, %v987
        %s992 = scalar_lea.vmem %s3, 8
        %v993 = vld [vmem:[%s992] sm:$0xf]
        %v994 = vld [vmem:[%s992 + $0x4] sm:$0x3]
        %v997 = vunpack.c.l.b16 %v993
        %v998 = vunpack.c.l.b16 %v994
        %v999 = vpack.c.b16 %v998, %v997
        %vm1000 = vcmask 97280
        %v1001 = vsel %vm1000, %v952, 0
        %v1003 = vsel %vm1000, %v954, 0
        %v1005 = vsel %vm1000, %v956, 0
        %v1007 = vsel %vm1000, %v958, 0
        %v1009 = vsel %vm1000, %v960, 0
        %v1011 = vsel %vm1000, %v962, 0
        %v1013 = vsel %vm1000, %v964, 0
        %v1015 = vsel %vm1000, %v991, 0
        %vm1017 = vcmask 1045504
        %v1019 = vsel %vm1017, %v999, 0
        %1021 = vmatpush.bf16.msra.mxu0 0
        %1022 = vmatpush.bf16.msra.mxu0 0
        %1023 = vmatpush.bf16.msra.mxu0 0
        %1024 = vmatpush.bf16.msra.mxu0 0
        %1025 = vmatpush.bf16.msra.mxu0 0
        %1026 = vmatpush.bf16.msra.mxu0 0
        %1027 = vmatpush.bf16.msra.mxu0 0
        %1028 = vmatpush.bf16.msra.mxu0 %v1019
        %1029 = vmatmul.bf16.gmra.mxu0 %v1001
        %v1030 = vpop.f32.mrf.mxu0
        %v1031 = vadd.f32 0.0, %v1030
        %v1032 = vpop.f32.mrf.mxu0
        %v1033 = vadd.f32 0.0, %v1032
        %1034 = vmatmul.bf16.gmra.mxu0 %v1003
        %v1035 = vpop.f32.mrf.mxu0
        %v1036 = vadd.f32 0.0, %v1035
        %v1037 = vpop.f32.mrf.mxu0
        %v1038 = vadd.f32 0.0, %v1037
        %1039 = vmatmul.bf16.gmra.mxu0 %v1005
        %v1040 = vpop.f32.mrf.mxu0
        %v1041 = vadd.f32 0.0, %v1040
        %v1042 = vpop.f32.mrf.mxu0
        %v1043 = vadd.f32 0.0, %v1042
        %1044 = vmatmul.bf16.gmra.mxu0 %v1007
        %v1045 = vpop.f32.mrf.mxu0
        %v1046 = vadd.f32 0.0, %v1045
        %v1047 = vpop.f32.mrf.mxu0
        %v1048 = vadd.f32 0.0, %v1047
        %1049 = vmatmul.bf16.gmra.mxu0 %v1009
        %v1050 = vpop.f32.mrf.mxu0
        %v1051 = vadd.f32 0.0, %v1050
        %v1052 = vpop.f32.mrf.mxu0
        %v1053 = vadd.f32 0.0, %v1052
        %1054 = vmatmul.bf16.gmra.mxu0 %v1011
        %v1055 = vpop.f32.mrf.mxu0
        %v1056 = vadd.f32 0.0, %v1055
        %v1057 = vpop.f32.mrf.mxu0
        %v1058 = vadd.f32 0.0, %v1057
        %1059 = vmatmul.bf16.gmra.mxu0 %v1013
        %v1060 = vpop.f32.mrf.mxu0
        %v1061 = vadd.f32 0.0, %v1060
        %v1062 = vpop.f32.mrf.mxu0
        %v1063 = vadd.f32 0.0, %v1062
        %1064 = vmatmul.bf16.gmra.mxu0 %v1015
        %v1065 = vpop.f32.mrf.mxu0
        %v1066 = vadd.f32 0.0, %v1065
        %v1067 = vpop.f32.mrf.mxu0
        %v1068 = vadd.f32 0.0, %v1067
        %1069 = vdwg.mxu0
        %v1072 = vunpack.c.l.b16 %v965
        %v1073 = vunpack.c.l.b16 %v966
        %v1074 = vpack.c.b16 %v1073, %v1072
        %v1075 = vsel %vm1000, %v950, 0
        %v1078 = vsel %vm1017, %v1074, 0
        %1080 = vmatpush.bf16.msra.mxu0 0
        %1081 = vmatpush.bf16.msra.mxu0 0
        %1082 = vmatpush.bf16.msra.mxu0 0
        %1083 = vmatpush.bf16.msra.mxu0 0
        %1084 = vmatpush.bf16.msra.mxu0 0
        %1085 = vmatpush.bf16.msra.mxu0 0
        %1086 = vmatpush.bf16.msra.mxu0 0
        %1087 = vmatpush.bf16.msra.mxu0 %v1078
        %1088 = vmatmul.bf16.gmra.mxu0 %v1075
        %v1089 = vpop.f32.mrf.mxu0
        %v1090 = vadd.f32 %v1031, %v1089
        %v1091 = vpop.f32.mrf.mxu0
        %v1092 = vadd.f32 %v1033, %v1091
        %1093 = vmatmul.bf16.gmra.mxu0 %v1001
        %v1094 = vpop.f32.mrf.mxu0
        %v1095 = vadd.f32 %v1036, %v1094
        %v1096 = vpop.f32.mrf.mxu0
        %v1097 = vadd.f32 %v1038, %v1096
        %1098 = vmatmul.bf16.gmra.mxu0 %v1003
        %v1099 = vpop.f32.mrf.mxu0
        %v1100 = vadd.f32 %v1041, %v1099
        %v1101 = vpop.f32.mrf.mxu0
        %v1102 = vadd.f32 %v1043, %v1101
        %1103 = vmatmul.bf16.gmra.mxu0 %v1005
        %v1104 = vpop.f32.mrf.mxu0
        %v1105 = vadd.f32 %v1046, %v1104
        %v1106 = vpop.f32.mrf.mxu0
        %v1107 = vadd.f32 %v1048, %v1106
        %1108 = vmatmul.bf16.gmra.mxu0 %v1007
        %v1109 = vpop.f32.mrf.mxu0
        %v1110 = vadd.f32 %v1051, %v1109
        %v1111 = vpop.f32.mrf.mxu0
        %v1112 = vadd.f32 %v1053, %v1111
        %1113 = vmatmul.bf16.gmra.mxu0 %v1009
        %v1114 = vpop.f32.mrf.mxu0
        %v1115 = vadd.f32 %v1056, %v1114
        %v1116 = vpop.f32.mrf.mxu0
        %v1117 = vadd.f32 %v1058, %v1116
        %1118 = vmatmul.bf16.gmra.mxu0 %v1011
        %v1119 = vpop.f32.mrf.mxu0
        %v1120 = vadd.f32 %v1061, %v1119
        %v1121 = vpop.f32.mrf.mxu0
        %v1122 = vadd.f32 %v1063, %v1121
        %1123 = vmatmul.bf16.gmra.mxu0 %v1013
        %v1124 = vpop.f32.mrf.mxu0
        %v1125 = vadd.f32 %v1066, %v1124
        %v1126 = vpop.f32.mrf.mxu0
        %v1127 = vadd.f32 %v1068, %v1126
        %1128 = vdwg.mxu0
        %v1130 = vshrl.u32 %v750, 16
        %v1132 = vshll.u32 %v750, 16
        %v1134 = vrot.slane %v1132, 1
        %v1135 = vor.u32 %v1130, %v1134
        %v1137 = vshll.u32 %v760, 16
        %v1139 = vrot.slane %v1137, 1
        %v1140 = vsel %vm761, %v1135, %v1139
        %1141 = vrot.lane.b32.xlu0 %v1140, 4
        %v1142 = vpop.permute.xlu0 %1141
        %v1145 = vrot.slane %v750, 1
        %v1146 = vrot.slane %v760, 1
        %v1147 = vsel %vm890, %v1145, %v1146
        %1148 = vrot.lane.b32.xlu0 %v1147, 8
        %v1149 = vpop.permute.xlu0 %1148
        %v1151 = vsel %vm931, %v750, %v1142
        %v1153 = vsel %vm948, %v1151, %v1149
        %s1154 = scalar_lea.vmem %s3, 16
        %v1155 = vld [vmem:[%s1154] sm:$0xf]
        %v1156 = vld [vmem:[%s1154 + $0x4] sm:$0x3]
        %v1159 = vunpack.c.l.b16 %v1155
        %v1160 = vunpack.c.l.b16 %v1156
        %v1161 = vpack.c.b16 %v1160, %v1159
        %v1162 = vsel %vm1000, %v1153, 0
        %v1165 = vsel %vm1017, %v1161, 0
        %1167 = vmatpush.bf16.msra.mxu0 0
        %1168 = vmatpush.bf16.msra.mxu0 0
        %1169 = vmatpush.bf16.msra.mxu0 0
        %1170 = vmatpush.bf16.msra.mxu0 0
        %1171 = vmatpush.bf16.msra.mxu0 0
        %1172 = vmatpush.bf16.msra.mxu0 0
        %1173 = vmatpush.bf16.msra.mxu0 0
        %1174 = vmatpush.bf16.msra.mxu0 %v1165
        %1175 = vmatmul.bf16.gmra.mxu0 %v1003
        %v1176 = vpop.f32.mrf.mxu0
        %v1177 = vadd.f32 0.0, %v1176
        %v1178 = vpop.f32.mrf.mxu0
        %v1179 = vadd.f32 0.0, %v1178
        %1180 = vmatmul.bf16.gmra.mxu0 %v1005
        %v1181 = vpop.f32.mrf.mxu0
        %v1182 = vadd.f32 0.0, %v1181
        %v1183 = vpop.f32.mrf.mxu0
        %v1184 = vadd.f32 0.0, %v1183
        %1185 = vmatmul.bf16.gmra.mxu0 %v1007
        %v1186 = vpop.f32.mrf.mxu0
        %v1187 = vadd.f32 0.0, %v1186
        %v1188 = vpop.f32.mrf.mxu0
        %v1189 = vadd.f32 0.0, %v1188
        %1190 = vmatmul.bf16.gmra.mxu0 %v1009
        %v1191 = vpop.f32.mrf.mxu0
        %v1192 = vadd.f32 0.0, %v1191
        %v1193 = vpop.f32.mrf.mxu0
        %v1194 = vadd.f32 0.0, %v1193
        %1195 = vmatmul.bf16.gmra.mxu0 %v1011
        %v1196 = vpop.f32.mrf.mxu0
        %v1197 = vadd.f32 0.0, %v1196
        %v1198 = vpop.f32.mrf.mxu0
        %v1199 = vadd.f32 0.0, %v1198
        %1200 = vmatmul.bf16.gmra.mxu0 %v1013
        %v1201 = vpop.f32.mrf.mxu0
        %v1202 = vadd.f32 0.0, %v1201
        %v1203 = vpop.f32.mrf.mxu0
        %v1204 = vadd.f32 0.0, %v1203
        %1205 = vmatmul.bf16.gmra.mxu0 %v1015
        %v1206 = vpop.f32.mrf.mxu0
        %v1207 = vadd.f32 0.0, %v1206
        %v1208 = vpop.f32.mrf.mxu0
        %v1209 = vadd.f32 0.0, %v1208
        %1210 = vmatmul.bf16.gmra.mxu0 %v1162
        %v1211 = vpop.f32.mrf.mxu0
        %v1212 = vadd.f32 0.0, %v1211
        %v1213 = vpop.f32.mrf.mxu0
        %v1214 = vadd.f32 0.0, %v1213
        %1215 = vdwg.mxu0
        %v1216 = vadd.f32 %v1090, %v1177
        %v1217 = vadd.f32 %v1092, %v1179
        %v1218 = vadd.f32 %v1095, %v1182
        %v1219 = vadd.f32 %v1097, %v1184
        %v1220 = vadd.f32 %v1100, %v1187
        %v1221 = vadd.f32 %v1102, %v1189
        %v1222 = vadd.f32 %v1105, %v1192
        %v1223 = vadd.f32 %v1107, %v1194
        %v1224 = vadd.f32 %v1110, %v1197
        %v1225 = vadd.f32 %v1112, %v1199
        %v1226 = vadd.f32 %v1115, %v1202
        %v1227 = vadd.f32 %v1117, %v1204
        %v1228 = vadd.f32 %v1120, %v1207
        %v1229 = vadd.f32 %v1122, %v1209
        %v1230 = vadd.f32 %v1125, %v1212
        %v1231 = vadd.f32 %v1127, %v1214
        %v1232 = vld [vmem:[%s6] sm:$0x1]
        %v1234 = vperm.slane %v1232, 0
        %v1236 = vadd.f32 %v1216, %v1234
        %v1237 = vadd.f32 %v1217, %v1234
        %v1238 = vadd.f32 %v1218, %v1234
        %v1239 = vadd.f32 %v1219, %v1234
        %v1240 = vadd.f32 %v1220, %v1234
        %v1241 = vadd.f32 %v1221, %v1234
        %v1242 = vadd.f32 %v1222, %v1234
        %v1243 = vadd.f32 %v1223, %v1234
        %v1244 = vadd.f32 %v1224, %v1234
        %v1245 = vadd.f32 %v1225, %v1234
        %v1246 = vadd.f32 %v1226, %v1234
        %v1247 = vadd.f32 %v1227, %v1234
        %v1248 = vadd.f32 %v1228, %v1234
        %v1249 = vadd.f32 %v1229, %v1234
        %v1250 = vadd.f32 %v1230, %v1234
        %v1251 = vadd.f32 %v1231, %v1234
        %v1252 = vmax.f32 %v1236, 0.0
        %v1253 = vmax.f32 %v1237, 0.0
        %v1254 = vmax.f32 %v1238, 0.0
        %v1255 = vmax.f32 %v1239, 0.0
        %v1256 = vmax.f32 %v1240, 0.0
        %v1257 = vmax.f32 %v1241, 0.0
        %v1258 = vmax.f32 %v1242, 0.0
        %v1259 = vmax.f32 %v1243, 0.0
        %v1260 = vmax.f32 %v1244, 0.0
        %v1261 = vmax.f32 %v1245, 0.0
        %v1262 = vmax.f32 %v1246, 0.0
        %v1263 = vmax.f32 %v1247, 0.0
        %v1264 = vmax.f32 %v1248, 0.0
        %v1265 = vmax.f32 %v1249, 0.0
        %v1266 = vmax.f32 %v1250, 0.0
        %v1267 = vmax.f32 %v1251, 0.0
        %v1268 = vpack.c.bf16 %v1253, %v1252
        %v1269 = vpack.c.bf16 %v1255, %v1254
        %v1270 = vpack.c.bf16 %v1257, %v1256
        %v1271 = vpack.c.bf16 %v1259, %v1258
        %v1272 = vpack.c.bf16 %v1261, %v1260
        %v1273 = vpack.c.bf16 %v1263, %v1262
        %v1274 = vpack.c.bf16 %v1265, %v1264
        %v1275 = vpack.c.bf16 %v1267, %v1266
        %v1276 = vld [vmem:[%s4] sm:$0x3]
        %v1277 = vld [vmem:[%s7] sm:$0x1]
        %v1279 = vperm.slane %v1277, 0
        %v1282 = vsel %vm931, %v1268, 0
        %v1285 = vsel %vm931, %v1269, 0
        %v1288 = vsel %vm931, %v1270, 0
        %v1291 = vsel %vm931, %v1271, 0
        %v1294 = vsel %vm931, %v1272, 0
        %v1297 = vsel %vm931, %v1273, 0
        %v1300 = vsel %vm931, %v1274, 0
        %v1303 = vsel %vm931, %v1275, 0
        %vm1305 = vcmask 1041408
        %v1307 = vsel %vm1305, %v1276, 0
        %1309 = vmatpush.bf16.msra.mxu0 0
        %1310 = vmatpush.bf16.msra.mxu0 0
        %1311 = vmatpush.bf16.msra.mxu0 0
        %1312 = vmatpush.bf16.msra.mxu0 0
        %1313 = vmatpush.bf16.msra.mxu0 0
        %1314 = vmatpush.bf16.msra.mxu0 0
        %1315 = vmatpush.bf16.msra.mxu0 0
        %1316 = vmatpush.bf16.msra.mxu0 %v1307
        %1317 = vmatmul.bf16.gmra.mxu0 %v1282
        %v1318 = vpop.f32.mrf.mxu0
        %v1319 = vadd.f32 %v1279, %v1318
        %v1320 = vpop.f32.mrf.mxu0
        %v1321 = vadd.f32 %v1279, %v1320
        %1322 = vmatmul.bf16.gmra.mxu0 %v1285
        %v1323 = vpop.f32.mrf.mxu0
        %v1324 = vadd.f32 %v1279, %v1323
        %v1325 = vpop.f32.mrf.mxu0
        %v1326 = vadd.f32 %v1279, %v1325
        %1327 = vmatmul.bf16.gmra.mxu0 %v1288
        %v1328 = vpop.f32.mrf.mxu0
        %v1329 = vadd.f32 %v1279, %v1328
        %v1330 = vpop.f32.mrf.mxu0
        %v1331 = vadd.f32 %v1279, %v1330
        %1332 = vmatmul.bf16.gmra.mxu0 %v1291
        %v1333 = vpop.f32.mrf.mxu0
        %v1334 = vadd.f32 %v1279, %v1333
        %v1335 = vpop.f32.mrf.mxu0
        %v1336 = vadd.f32 %v1279, %v1335
        %1337 = vmatmul.bf16.gmra.mxu0 %v1294
        %v1338 = vpop.f32.mrf.mxu0
        %v1339 = vadd.f32 %v1279, %v1338
        %v1340 = vpop.f32.mrf.mxu0
        %v1341 = vadd.f32 %v1279, %v1340
        %1342 = vmatmul.bf16.gmra.mxu0 %v1297
        %v1343 = vpop.f32.mrf.mxu0
        %v1344 = vadd.f32 %v1279, %v1343
        %v1345 = vpop.f32.mrf.mxu0
        %v1346 = vadd.f32 %v1279, %v1345
        %1347 = vmatmul.bf16.gmra.mxu0 %v1300
        %v1348 = vpop.f32.mrf.mxu0
        %v1349 = vadd.f32 %v1279, %v1348
        %v1350 = vpop.f32.mrf.mxu0
        %v1351 = vadd.f32 %v1279, %v1350
        %1352 = vmatmul.bf16.gmra.mxu0 %v1303
        %v1353 = vpop.f32.mrf.mxu0
        %v1354 = vadd.f32 %v1279, %v1353
        %v1355 = vpop.f32.mrf.mxu0
        %v1356 = vadd.f32 %v1279, %v1355
        %1357 = vdwg.mxu0
        %v1358 = vadd.f32 %v1319, %v398
        %v1359 = vadd.f32 %v1321, %v399
        %v1360 = vadd.f32 %v1324, %v400
        %v1361 = vadd.f32 %v1326, %v401
        %v1362 = vadd.f32 %v1329, %v402
        %v1363 = vadd.f32 %v1331, %v403
        %v1364 = vadd.f32 %v1334, %v404
        %v1365 = vadd.f32 %v1336, %v405
        %v1366 = vadd.f32 %v1339, %v406
        %v1367 = vadd.f32 %v1341, %v407
        %v1368 = vadd.f32 %v1344, %v408
        %v1369 = vadd.f32 %v1346, %v409
        %v1370 = vadd.f32 %v1349, %v410
        %v1371 = vadd.f32 %v1351, %v411
        %v1372 = vadd.f32 %v1354, %v412
        %v1373 = vadd.f32 %v1356, %v413
        %v1374 = vmax.f32 %v1358, 0.0
        %v1375 = vmax.f32 %v1359, 0.0
        %v1376 = vmax.f32 %v1360, 0.0
        %v1377 = vmax.f32 %v1361, 0.0
        %v1378 = vmax.f32 %v1362, 0.0
        %v1379 = vmax.f32 %v1363, 0.0
        %v1380 = vmax.f32 %v1364, 0.0
        %v1381 = vmax.f32 %v1365, 0.0
        %v1382 = vmax.f32 %v1366, 0.0
        %v1383 = vmax.f32 %v1367, 0.0
        %v1384 = vmax.f32 %v1368, 0.0
        %v1385 = vmax.f32 %v1369, 0.0
        %v1386 = vmax.f32 %v1370, 0.0
        %v1387 = vmax.f32 %v1371, 0.0
        %v1388 = vmax.f32 %v1372, 0.0
        %v1389 = vmax.f32 %v1373, 0.0
        %1390 = vst.msk [vmem:[%s390] sm:$0xff] %vm436, %v1374
        %1391 = vst.msk [vmem:[%s390 + $0x8] sm:$0xff] %vm436, %v1375
        %1392 = vst.msk [vmem:[%s390 + $0x10] sm:$0xff] %vm436, %v1376
        %1393 = vst.msk [vmem:[%s390 + $0x18] sm:$0xff] %vm436, %v1377
        %1394 = vst.msk [vmem:[%s390 + $0x20] sm:$0xff] %vm436, %v1378
        %1395 = vst.msk [vmem:[%s390 + $0x28] sm:$0xff] %vm436, %v1379
        %1396 = vst.msk [vmem:[%s390 + $0x30] sm:$0xff] %vm436, %v1380
        %1397 = vst.msk [vmem:[%s390 + $0x38] sm:$0xff] %vm436, %v1381
        %1398 = vst.msk [vmem:[%s390 + $0x40] sm:$0xff] %vm436, %v1382
        %1399 = vst.msk [vmem:[%s390 + $0x48] sm:$0xff] %vm436, %v1383
        %1400 = vst.msk [vmem:[%s390 + $0x50] sm:$0xff] %vm436, %v1384
        %1401 = vst.msk [vmem:[%s390 + $0x58] sm:$0xff] %vm436, %v1385
        %1402 = vst.msk [vmem:[%s390 + $0x60] sm:$0xff] %vm436, %v1386
        %1403 = vst.msk [vmem:[%s390 + $0x68] sm:$0xff] %vm436, %v1387
        %1404 = vst.msk [vmem:[%s390 + $0x70] sm:$0xff] %vm436, %v1388
        %1405 = vst.msk [vmem:[%s390 + $0x78] sm:$0xff] %vm436, %v1389
        %s1406 = sand.u32 %s232, 1
        %s1407 = scalar_lea.sflag [#allocation4], %s1406
        %s1408 = sand.u32 %s232, 1
        %s1409 = smul.addr %s1408, 128
        %s1410 = scalar_lea.vmem [#allocation7], %s1409
        // Predicated region
        $region61: #{tpu_custom_call.1} parent=51 // pred_check
          %p1411 = pneg %p242
        $region62: #{tpu_custom_call.1} parent=51 // pred_check_branch
          %1413 = sbr.rel (%p1411) target = $region64
        $region63: #{tpu_custom_call.1} parent=51 // pred_region
          %s1414 = smul.u32 8, %s33
          %1416 = vsyncadd %s1407, 0
          %s1417 = smul.addr %s1414, 2
          %s1418 = smul.addr %s32, 32
          %s1419 = sadd.s32 %s1417, %s1418
          %s1420 = smul.addr %s1419, 8
          %s1421 = scalar_lea.hbm %s8, %s1420
          %s1422 = sshll.u32 %s1410, 4
          %s1423 = int_to_ptr.vmem [resolvable:$true] %s1422
          %s1424 = sshll.u32 %s1421, 4
          %s1425 = int_to_ptr.hbm [resolvable:$true] %s1424
          %1430 = dma.vmem_to_hbm [thread:$0]  %s1423, 2048, %s1425, %s1407, 128, 128, 8
        $region64: #{tpu_custom_call.1} parent=51 // pred_fallthru
          _
      $region52: #{tpu_custom_call.1} parent=5 // pred_fallthru
        _
      %p1431 = scmp.le.s32.totalorder 2, %s23
      // Predicated region
      $region65: #{tpu_custom_call.1} parent=5 // pred_check
        %p1432 = pneg %p1431
      $region66: #{tpu_custom_call.1} parent=5 // pred_check_branch
        %1434 = sbr.rel (%p1432) target = $region68
      $region67: #{tpu_custom_call.1} parent=5 // pred_region
        %s1435 = ssub.s32 %s23, 2
        // Predicated region
        $region69: #{tpu_custom_call.1} parent=67 // pred_check
          %p1436 = pneg %p248
        $region70: #{tpu_custom_call.1} parent=67 // pred_check_branch
          %1438 = sbr.rel (%p1436) target = $region72
        $region71: #{tpu_custom_call.1} parent=67 // pred_region
          %s1439 = sand.u32 %s233, 1
          %s1440 = scalar_lea.sflag [#allocation4], %s1439
          %s1441 = sand.u32 %s233, 1
          %s1442 = smul.addr %s1441, 128
          %s1443 = scalar_lea.vmem [#allocation7], %s1442
          %1445 = dma.done %s1440, 2048
        $region72: #{tpu_custom_call.1} parent=67 // pred_fallthru
          _
      $region68: #{tpu_custom_call.1} parent=5 // pred_fallthru
        _
    $region6: #{tpu_custom_call.1} parent=1 // loop_footer
      %s27 = sadd.s32 1, %s23
    $region7: #{tpu_custom_call.1} parent=1 // loop_footer_branch
      %22 = sbr.rel target = $region3
    $region8: #{tpu_custom_call.1} parent=1 // loop_exit
      _
    %1446 = vsyncpa [#allocation3], 1
    %s1447 = scalar_lea.sflag [#allocation3], 1
    %1448 = vsyncpa %s1447, 1
    %1449 = vsyncpa [#allocation6], 1
    %s1450 = scalar_lea.sflag [#allocation6], 1
    %1451 = vsyncpa %s1450, 1
    %1452 = vsyncpa [#allocation4], 1
    %s1453 = scalar_lea.sflag [#allocation4], 1
    %1454 = vsyncpa %s1453, 1

</llo_original>
